<compile_context>
chip_gen: v7x
topology: tpu7x:2x2x1
jax: 0.10.0
libtpu: 0.0.40
codegen_flags: <defaults>
</compile_context>

<pallas_src>
import functools
import math

import numpy as np
import jax
import jax.numpy as jnp
from jax.experimental import pallas as pl
from jax.experimental.pallas import tpu as pltpu

LEAK = 0.2
ACT_GAIN = math.sqrt(2.0)
NOISE_STRENGTH = 0.1          # learned per-layer scalar in StyleGAN2; fixed here
LATENT_DIM = 128              # small-shape stand-in for 512
CH = 128                      # feature channels at every resolution
N_LATENTS = 8                 # w+ latents for a 4->8->16->32 generator
POOL_OUT = 8                  # small-shape stand-in for 256
RGB_PAD = 128                 # toRGB output padded to a full lane tile


def _leaky(x):
    return jnp.where(x >= 0, x, LEAK * x)


# --------------------------------------------------------------------------
# Kernel 1: fused latent mapper (PixelNorm + 4x EqualLinear) + style affines
# --------------------------------------------------------------------------
def mapper_affine_kernel(x_ref, mw_ref, mb_ref, aw_ref, ab_ref, c_ref, s_ref, *,
                         apply_mapper, B, L):
    h = x_ref[...].astype(jnp.float32)                       # (B*L, D)
    if apply_mapper:
        # PixelNorm
        h = h * jax.lax.rsqrt(jnp.mean(h * h, axis=-1, keepdims=True) + 1e-8)
        for l in range(mw_ref.shape[0]):
            h = jnp.dot(h, mw_ref[l], preferred_element_type=jnp.float32)
            h = _leaky(h + mb_ref[l]) * ACT_GAIN
    c_ref[...] = h.astype(c_ref.dtype)

    # per-layer style affines: styles[l] = codes[:, l] @ A_l + b_l
    h3 = h.reshape(B, L, h.shape[-1])                        # (B, L, D)
    for l in range(aw_ref.shape[0]):
        s_ref[l] = (jnp.dot(h3[:, l, :], aw_ref[l],
                            preferred_element_type=jnp.float32) + ab_ref[l])


def run_mapper_affine(x, params, *, apply_mapper):
    B, L, D = x.shape
    C = params["aff_w"].shape[-1]
    kern = functools.partial(mapper_affine_kernel,
                             apply_mapper=apply_mapper, B=B, L=L)
    codes_flat, styles = pl.pallas_call(
        kern,
        out_shape=(jax.ShapeDtypeStruct((B * L, D), jnp.float32),
                   jax.ShapeDtypeStruct((L, B, C), jnp.float32)),
    )(x.reshape(B * L, D), params["map_w"], params["map_b"],
      params["aff_w"], params["aff_b"])
    return codes_flat.reshape(B, L, D), styles


# --------------------------------------------------------------------------
# Kernel 2: fused generator stage
#   in-kernel im2col (9 taps, single K=9*Cin matmul) + modulation + demod
#   + noise + bias + leaky act + toRGB (lane-dense, padded to 128) + skip add
# --------------------------------------------------------------------------
def stage_kernel(x_ref, wc_ref, w2_ref, sc_ref, sr_ref, wr_ref, n_ref,
                 bc_ref, br_ref, rp_ref, xo_ref, ro_ref, *,
                 H, W, noise_strength):
    HW = H * W
    x = x_ref[0].astype(jnp.float32)                 # (HW, Cin)
    s_conv = sc_ref[0, 0]                            # (1, Cin)

    # modulate input channels once (equivalent to modulating every tap)
    xm = x * s_conv

    # build the 9 conv taps in VMEM via sublane rotations + border masks
    idx = jax.lax.broadcasted_iota(jnp.int32, (HW, 1), 0)
    row = idx // W
    col = idx - row * W
    taps = []
    for dy in (-1, 0, 1):
        for dx in (-1, 0, 1):
            s = dy * W + dx
            t = xm if s == 0 else pltpu.roll(xm, shift=(-s) % HW, axis=0)
            valid = None
            if dy == 1:
                valid = row < (H - 1)
            elif dy == -1:
                valid = row >= 1
            if dx == 1:
                c = col < (W - 1)
                valid = c if valid is None else jnp.logical_and(valid, c)
            elif dx == -1:
                c = col >= 1
                valid = c if valid is None else jnp.logical_and(valid, c)
            if valid is not None:
                t = jnp.where(valid, t, 0.0)
            taps.append(t)
    patches = jnp.concatenate(taps, axis=-1).astype(jnp.bfloat16)   # (HW, 9*Cin)

    # single MXU matmul, K = 9*Cin, internal accumulation in f32
    acc = jnp.dot(patches, wc_ref[...], preferred_element_type=jnp.float32)

    # demodulation: rsqrt(style^2 @ sum_t w_t^2 + eps), one (1,Cin)@(Cin,Cout)
    demod = jax.lax.rsqrt(
        jnp.dot(s_conv * s_conv, w2_ref[...],
                preferred_element_type=jnp.float32) + 1e-8)          # (1, Cout)
    acc = acc * demod

    if noise_strength != 0.0:
        acc = acc + noise_strength * n_ref[0]                        # (HW,1) bcast
    acc = acc + bc_ref[...]                                          # (1, Cout)
    acc = _leaky(acc) * ACT_GAIN
    xo_ref[0] = acc.astype(xo_ref.dtype)

    # fused toRGB (modulated 1x1 conv, no demod/noise/act) + skip add,
    # padded to 128 output lanes so the store is lane-dense.
    rgb_in = (acc * sr_ref[0, 0]).astype(jnp.bfloat16)
    rgb = jnp.dot(rgb_in, wr_ref[...], preferred_element_type=jnp.float32)
    ro_ref[0] = (rgb + br_ref[...] + rp_ref[0]).astype(ro_ref.dtype)


def run_stage(x, rgb_prev, styles4, noise, *, w_flat, w2, b_conv, w_rgb, b_rgb,
              conv_idx, rgb_idx, H, noise_strength):
    B, HW, Cin = x.shape
    Cout = w2.shape[-1]
    kern = functools.partial(stage_kernel, H=H, W=H,
                             noise_strength=noise_strength)
    return pl.pallas_call(
        kern,
        out_shape=(jax.ShapeDtypeStruct((B, HW, Cout), jnp.float32),
                   jax.ShapeDtypeStruct((B, HW, RGB_PAD), jnp.float32)),
        grid=(B,),
        in_specs=[
            pl.BlockSpec((1, HW, Cin), lambda b: (b, 0, 0)),              # x
            pl.BlockSpec((9 * Cin, Cout), lambda b: (0, 0)),              # w_flat
            pl.BlockSpec((Cin, Cout), lambda b: (0, 0)),                  # W2
            pl.BlockSpec((1, 1, 1, Cin), lambda b: (conv_idx, b, 0, 0)),  # conv style
            pl.BlockSpec((1, 1, 1, Cout), lambda b: (rgb_idx, b, 0, 0)),  # rgb style
            pl.BlockSpec((Cout, RGB_PAD), lambda b: (0, 0)),              # rgb weight
            pl.BlockSpec((1, HW, 1), lambda b: (b, 0, 0)),                # noise
            pl.BlockSpec((1, Cout), lambda b: (0, 0)),                    # conv bias
            pl.BlockSpec((1, RGB_PAD), lambda b: (0, 0)),                 # rgb bias
            pl.BlockSpec((1, HW, RGB_PAD), lambda b: (b, 0, 0)),          # rgb skip
        ],
        out_specs=(pl.BlockSpec((1, HW, Cout), lambda b: (b, 0, 0)),
                   pl.BlockSpec((1, HW, RGB_PAD), lambda b: (b, 0, 0))),
        compiler_params=pltpu.CompilerParams(
            dimension_semantics=("parallel",),
            vmem_limit_bytes=48 * 1024 * 1024),
    )(x, w_flat, w2, styles4, styles4, w_rgb, noise, b_conv, b_rgb, rgb_prev)


# --------------------------------------------------------------------------
# Kernel 3: adaptive average pool as a pooling-matrix matmul (lane-dense N)
# --------------------------------------------------------------------------
def pool_kernel(p_ref, x_ref, o_ref):
    o_ref[0] = jnp.dot(p_ref[...], x_ref[0],
                       preferred_element_type=jnp.float32).astype(o_ref.dtype)


def _adaptive_pool_matrix(in_size, out_size):
    P = np.zeros((out_size, in_size), np.float32)
    for i in range(out_size):
        s = (i * in_size) // out_size
        e = -((-(i + 1) * in_size) // out_size)   # ceil((i+1)*in/out)
        P[i, s:e] = 1.0 / (e - s)
    return P


def run_pool(x_flat, H, W, Ho, Wo):
    B, HW, C = x_flat.shape
    P2 = jnp.asarray(np.kron(_adaptive_pool_matrix(H, Ho),
                             _adaptive_pool_matrix(W, Wo)))   # (Ho*Wo, H*W)
    return pl.pallas_call(
        pool_kernel,
        out_shape=jax.ShapeDtypeStruct((B, Ho * Wo, C), jnp.float32),
        grid=(B,),
        in_specs=[pl.BlockSpec((Ho * Wo, HW), lambda b: (0, 0)),
                  pl.BlockSpec((1, HW, C), lambda b: (b, 0, 0))],
        out_specs=pl.BlockSpec((1, Ho * Wo, C), lambda b: (b, 0, 0)),
        compiler_params=pltpu.CompilerParams(dimension_semantics=("parallel",)),
    )(P2, x_flat)


# --------------------------------------------------------------------------
# Plain-JAX glue: nearest upsample, parameter init
# --------------------------------------------------------------------------
def upsample2x(x_flat, H, W):
    B, HW, C = x_flat.shape
    xi = x_flat.reshape(B, H, W, C)
    xi = jnp.repeat(jnp.repeat(xi, 2, axis=1), 2, axis=2)
    return xi.reshape(B, 4 * HW, C)


def init_params(key):
    D, C = LATENT_DIM, CH
    ks = jax.random.split(key, 16)
    p = {}
    # mapper: 4 EqualLinear layers (equalized-lr scale folded into weights)
    p["map_w"] = jax.random.normal(ks[0], (4, D, D), jnp.float32) / math.sqrt(D)
    p["map_b"] = jnp.zeros((4, 1, D), jnp.float32)
    # style affines for the 8 style-consuming layers (bias init = 1, StyleGAN2)
    p["aff_w"] = jax.random.normal(ks[1], (8, D, C), jnp.float32) / math.sqrt(D)
    p["aff_b"] = jnp.ones((8, 1, C), jnp.float32)
    # learned constant 4x4 input
    p["const"] = jax.random.normal(ks[2], (1, 16, C), jnp.float32)

    for i, res in enumerate((4, 8, 16, 32)):
        w = jax.random.normal(ks[3 + 2 * i], (9, C, C), jnp.float32) / math.sqrt(9 * C)
        # kernel-ready forms: flattened bf16 weight for the single K=9*Cin matmul
        # and the style-independent demod matrix W2 = sum_t w_t*w_t (f32).
        p[f"conv{res}_wflat"] = w.reshape(9 * C, C).astype(jnp.bfloat16)
        p[f"conv{res}_w2"] = jnp.sum(w * w, axis=0)
        p[f"conv{res}_b"] = jnp.zeros((1, C), jnp.float32)
        wr = jax.random.normal(ks[4 + 2 * i], (C, 3), jnp.float32) / math.sqrt(C)
        p[f"rgb{res}_w"] = jnp.pad(wr, ((0, 0), (0, RGB_PAD - 3))).astype(jnp.bfloat16)
        p[f"rgb{res}_b"] = jnp.zeros((1, RGB_PAD), jnp.float32)
    return p


# --------------------------------------------------------------------------
# Decoder (simplified StyleGANv2 skip generator) + full StyleMapper forward
# --------------------------------------------------------------------------
def decoder_forward(codes, styles, params, noise_key, randomize_noise=True):
    B = codes.shape[0]
    styles4 = styles.reshape(N_LATENTS, B, 1, CH)
    keys = jax.random.split(noise_key, 4)

    def noise_for(k, hw):
        if randomize_noise:
            return jax.random.normal(k, (B, hw, 1), jnp.float32)
        # TODO(synk): real StyleGAN2 falls back to stored per-layer noise buffers.
        return jnp.zeros((B, hw, 1), jnp.float32)

    x = jnp.broadcast_to(params["const"], (B, 16, CH))
    rgb = jnp.zeros((B, 16, RGB_PAD), jnp.float32)
    H = 4
    for i, res in enumerate((4, 8, 16, 32)):
        if res != 4:
            # TODO(synk): nearest upsample still materialised in HBM; could be
            #             folded into the next conv's tap addressing.
            x = upsample2x(x, H, H)
            rgb = upsample2x(rgb, H, H)
            H = res
        x, rgb = run_stage(
            x, rgb, styles4, noise_for(keys[i], res * res),
            w_flat=params[f"conv{res}_wflat"], w2=params[f"conv{res}_w2"],
            b_conv=params[f"conv{res}_b"], w_rgb=params[f"rgb{res}_w"],
            b_rgb=params[f"rgb{res}_b"], conv_idx=2 * i, rgb_idx=2 * i + 1,
            H=res, noise_strength=NOISE_STRENGTH)
    return rgb, H


def style_mapper_forward(x, params, *, resize=True, latent_mask=None,
                         input_code=False, randomize_noise=True,
                         inject_latent=None, return_latents=False,
                         alpha=None, noise_key=None):
    B, L, D = x.shape
    if noise_key is None:
        noise_key = jax.random.PRNGKey(0)

    codes, styles = run_mapper_affine(x, params, apply_mapper=not input_code)

    if latent_mask is not None:
        for i in latent_mask:
            if inject_latent is not None:
                if alpha is not None:
                    codes = codes.at[:, i].set(
                        alpha * inject_latent[:, i] + (1 - alpha) * codes[:, i])
                else:
                    codes = codes.at[:, i].set(inject_latent[:, i])
            else:
                codes = codes.at[:, i].set(0.0)
        # styles must reflect the edited codes: rerun affines only.
        _, styles = run_mapper_affine(codes, params, apply_mapper=False)

    rgb_flat, H = decoder_forward(codes, styles, params, noise_key,
                                  randomize_noise=randomize_noise)

    if resize:
        pooled = run_pool(rgb_flat, H, H, POOL_OUT, POOL_OUT)   # (B, 64, 128)
        images = jnp.transpose(
            pooled[:, :, :3].reshape(B, POOL_OUT, POOL_OUT, 3), (0, 3, 1, 2))
    else:
        images = jnp.transpose(
            rgb_flat[:, :, :3].reshape(B, H, H, 3), (0, 3, 1, 2))

    if return_latents:
        return images, codes
    return images


if __name__ == "__main__":
    key = jax.random.PRNGKey(0)
    pkey, xkey, nkey = jax.random.split(key, 3)
    params = init_params(pkey)
    x = jax.random.normal(xkey, (2, N_LATENTS, LATENT_DIM), jnp.float32)

    images = style_mapper_forward(x, params, resize=True,
                                  randomize_noise=True, noise_key=nkey)
    jax.block_until_ready(images)
    assert images.shape == (2, 3, POOL_OUT, POOL_OUT)
    print("KERNEL_OK")
</pallas_src>

<mosaic_0001>
module attributes {stable_mosaic.version = 11 : i64} {
  func.func @mapper_affine_kernel(%arg0: memref<16x128xf32, #tpu.memory_space<vmem>>, %arg1: memref<4x128x128xf32, #tpu.memory_space<vmem>>, %arg2: memref<4x1x128xf32, #tpu.memory_space<vmem>>, %arg3: memref<8x128x128xf32, #tpu.memory_space<vmem>>, %arg4: memref<8x1x128xf32, #tpu.memory_space<vmem>>, %arg5: memref<16x128xf32, #tpu.memory_space<vmem>>, %arg6: memref<8x2x128xf32, #tpu.memory_space<vmem>>) attributes {dimension_semantics = [], scalar_prefetch = 0 : i64, scratch_operands = 0 : i64, tpu.core_type = #tpu.core_type<tc>} {
    %c0 = arith.constant 0 : index
    %c0_0 = arith.constant 0 : index
    %0 = vector.load %arg0[%c0, %c0_0] : memref<16x128xf32, #tpu.memory_space<vmem>>, vector<16x128xf32>
    %1 = arith.mulf %0, %0 : vector<16x128xf32>
    %cst = arith.constant dense<0.000000e+00> : vector<16xf32>
    %2 = vector.multi_reduction <add>, %1, %cst [1] : vector<16x128xf32> to vector<16xf32>
    %3 = vector.shape_cast %2 : vector<16xf32> to vector<16x1xf32>
    %cst_1 = arith.constant 1.280000e+02 : f32
    %4 = vector.broadcast %cst_1 : f32 to vector<16x1xf32>
    %5 = arith.divf %3, %4 : vector<16x1xf32>
    %cst_2 = arith.constant 9.99999993E-9 : f32
    %6 = vector.broadcast %cst_2 : f32 to vector<16x1xf32>
    %7 = arith.addf %5, %6 : vector<16x1xf32>
    %8 = math.rsqrt %7 : vector<16x1xf32>
    %9 = vector.broadcast %8 : vector<16x1xf32> to vector<16x128xf32>
    %10 = arith.mulf %0, %9 : vector<16x128xf32>
    %c0_3 = arith.constant 0 : index
    %c0_4 = arith.constant 0 : index
    %c0_5 = arith.constant 0 : index
    %11 = vector.load %arg1[%c0_3, %c0_4, %c0_5] : memref<4x128x128xf32, #tpu.memory_space<vmem>>, vector<1x128x128xf32>
    %12 = vector.shape_cast %11 : vector<1x128x128xf32> to vector<128x128xf32>
    %cst_6 = arith.constant dense<0.000000e+00> : vector<16x128xf32>
    %13 = tpu.matmul %10, %12, %cst_6 {dimension_numbers = #tpu.dot_dimension_numbers<[1], [0], [0], [1], [0, 0, 1, 1], [], []>} : vector<16x128xf32>, vector<128x128xf32>, vector<16x128xf32> -> vector<16x128xf32>
    %c0_7 = arith.constant 0 : index
    %c0_8 = arith.constant 0 : index
    %c0_9 = arith.constant 0 : index
    %14 = vector.load %arg2[%c0_7, %c0_8, %c0_9] : memref<4x1x128xf32, #tpu.memory_space<vmem>>, vector<1x1x128xf32>
    %15 = vector.shape_cast %14 : vector<1x1x128xf32> to vector<1x128xf32>
    %16 = vector.broadcast %15 : vector<1x128xf32> to vector<16x128xf32>
    %17 = arith.addf %13, %16 : vector<16x128xf32>
    %cst_10 = arith.constant 0.000000e+00 : f32
    %18 = vector.broadcast %cst_10 : f32 to vector<16x128xf32>
    %19 = arith.cmpf oge, %17, %18 : vector<16x128xf32>
    %cst_11 = arith.constant 2.000000e-01 : f32
    %20 = vector.broadcast %cst_11 : f32 to vector<16x128xf32>
    %21 = arith.mulf %20, %17 : vector<16x128xf32>
    %22 = arith.select %19, %17, %21 : vector<16x128xi1>, vector<16x128xf32>
    %cst_12 = arith.constant 1.41421354 : f32
    %23 = vector.broadcast %cst_12 : f32 to vector<16x128xf32>
    %24 = arith.mulf %22, %23 : vector<16x128xf32>
    %c1 = arith.constant 1 : index
    %c0_13 = arith.constant 0 : index
    %c0_14 = arith.constant 0 : index
    %25 = vector.load %arg1[%c1, %c0_13, %c0_14] : memref<4x128x128xf32, #tpu.memory_space<vmem>>, vector<1x128x128xf32>
    %26 = vector.shape_cast %25 : vector<1x128x128xf32> to vector<128x128xf32>
    %cst_15 = arith.constant dense<0.000000e+00> : vector<16x128xf32>
    %27 = tpu.matmul %24, %26, %cst_15 {dimension_numbers = #tpu.dot_dimension_numbers<[1], [0], [0], [1], [0, 0, 1, 1], [], []>} : vector<16x128xf32>, vector<128x128xf32>, vector<16x128xf32> -> vector<16x128xf32>
    %c1_16 = arith.constant 1 : index
    %c0_17 = arith.constant 0 : index
    %c0_18 = arith.constant 0 : index
    %28 = vector.load %arg2[%c1_16, %c0_17, %c0_18] : memref<4x1x128xf32, #tpu.memory_space<vmem>>, vector<1x1x128xf32>
    %29 = vector.shape_cast %28 : vector<1x1x128xf32> to vector<1x128xf32>
    %30 = vector.broadcast %29 : vector<1x128xf32> to vector<16x128xf32>
    %31 = arith.addf %27, %30 : vector<16x128xf32>
    %cst_19 = arith.constant 0.000000e+00 : f32
    %32 = vector.broadcast %cst_19 : f32 to vector<16x128xf32>
    %33 = arith.cmpf oge, %31, %32 : vector<16x128xf32>
    %cst_20 = arith.constant 2.000000e-01 : f32
    %34 = vector.broadcast %cst_20 : f32 to vector<16x128xf32>
    %35 = arith.mulf %34, %31 : vector<16x128xf32>
    %36 = arith.select %33, %31, %35 : vector<16x128xi1>, vector<16x128xf32>
    %cst_21 = arith.constant 1.41421354 : f32
    %37 = vector.broadcast %cst_21 : f32 to vector<16x128xf32>
    %38 = arith.mulf %36, %37 : vector<16x128xf32>
    %c2 = arith.constant 2 : index
    %c0_22 = arith.constant 0 : index
    %c0_23 = arith.constant 0 : index
    %39 = vector.load %arg1[%c2, %c0_22, %c0_23] : memref<4x128x128xf32, #tpu.memory_space<vmem>>, vector<1x128x128xf32>
    %40 = vector.shape_cast %39 : vector<1x128x128xf32> to vector<128x128xf32>
    %cst_24 = arith.constant dense<0.000000e+00> : vector<16x128xf32>
    %41 = tpu.matmul %38, %40, %cst_24 {dimension_numbers = #tpu.dot_dimension_numbers<[1], [0], [0], [1], [0, 0, 1, 1], [], []>} : vector<16x128xf32>, vector<128x128xf32>, vector<16x128xf32> -> vector<16x128xf32>
    %c2_25 = arith.constant 2 : index
    %c0_26 = arith.constant 0 : index
    %c0_27 = arith.constant 0 : index
    %42 = vector.load %arg2[%c2_25, %c0_26, %c0_27] : memref<4x1x128xf32, #tpu.memory_space<vmem>>, vector<1x1x128xf32>
    %43 = vector.shape_cast %42 : vector<1x1x128xf32> to vector<1x128xf32>
    %44 = vector.broadcast %43 : vector<1x128xf32> to vector<16x128xf32>
    %45 = arith.addf %41, %44 : vector<16x128xf32>
    %cst_28 = arith.constant 0.000000e+00 : f32
    %46 = vector.broadcast %cst_28 : f32 to vector<16x128xf32>
    %47 = arith.cmpf oge, %45, %46 : vector<16x128xf32>
    %cst_29 = arith.constant 2.000000e-01 : f32
    %48 = vector.broadcast %cst_29 : f32 to vector<16x128xf32>
    %49 = arith.mulf %48, %45 : vector<16x128xf32>
    %50 = arith.select %47, %45, %49 : vector<16x128xi1>, vector<16x128xf32>
    %cst_30 = arith.constant 1.41421354 : f32
    %51 = vector.broadcast %cst_30 : f32 to vector<16x128xf32>
    %52 = arith.mulf %50, %51 : vector<16x128xf32>
    %c3 = arith.constant 3 : index
    %c0_31 = arith.constant 0 : index
    %c0_32 = arith.constant 0 : index
    %53 = vector.load %arg1[%c3, %c0_31, %c0_32] : memref<4x128x128xf32, #tpu.memory_space<vmem>>, vector<1x128x128xf32>
    %54 = vector.shape_cast %53 : vector<1x128x128xf32> to vector<128x128xf32>
    %cst_33 = arith.constant dense<0.000000e+00> : vector<16x128xf32>
    %55 = tpu.matmul %52, %54, %cst_33 {dimension_numbers = #tpu.dot_dimension_numbers<[1], [0], [0], [1], [0, 0, 1, 1], [], []>} : vector<16x128xf32>, vector<128x128xf32>, vector<16x128xf32> -> vector<16x128xf32>
    %c3_34 = arith.constant 3 : index
    %c0_35 = arith.constant 0 : index
    %c0_36 = arith.constant 0 : index
    %56 = vector.load %arg2[%c3_34, %c0_35, %c0_36] : memref<4x1x128xf32, #tpu.memory_space<vmem>>, vector<1x1x128xf32>
    %57 = vector.shape_cast %56 : vector<1x1x128xf32> to vector<1x128xf32>
    %58 = vector.broadcast %57 : vector<1x128xf32> to vector<16x128xf32>
    %59 = arith.addf %55, %58 : vector<16x128xf32>
    %cst_37 = arith.constant 0.000000e+00 : f32
    %60 = vector.broadcast %cst_37 : f32 to vector<16x128xf32>
    %61 = arith.cmpf oge, %59, %60 : vector<16x128xf32>
    %cst_38 = arith.constant 2.000000e-01 : f32
    %62 = vector.broadcast %cst_38 : f32 to vector<16x128xf32>
    %63 = arith.mulf %62, %59 : vector<16x128xf32>
    %64 = arith.select %61, %59, %63 : vector<16x128xi1>, vector<16x128xf32>
    %cst_39 = arith.constant 1.41421354 : f32
    %65 = vector.broadcast %cst_39 : f32 to vector<16x128xf32>
    %66 = arith.mulf %64, %65 : vector<16x128xf32>
    %c0_40 = arith.constant 0 : index
    %c0_41 = arith.constant 0 : index
    %67 = vector.load %arg5[%c0_40, %c0_41] : memref<16x128xf32, #tpu.memory_space<vmem>>, vector<16x128xf32>
    tpu.vector_store %arg5[%c0_40, %c0_41], %66 {strides = array<i32>} : memref<16x128xf32, #tpu.memory_space<vmem>>, vector<16x128xf32>,
    %68 = vector.shape_cast %66 : vector<16x128xf32> to vector<2x8x128xf32>
    %69 = vector.extract_strided_slice %68 {offsets = [0, 0, 0], sizes = [2, 1, 128], strides = [1, 1, 1]} : vector<2x8x128xf32> to vector<2x1x128xf32>
    %70 = vector.shape_cast %69 : vector<2x1x128xf32> to vector<2x128xf32>
    %c0_42 = arith.constant 0 : index
    %c0_43 = arith.constant 0 : index
    %c0_44 = arith.constant 0 : index
    %71 = vector.load %arg3[%c0_42, %c0_43, %c0_44] : memref<8x128x128xf32, #tpu.memory_space<vmem>>, vector<1x128x128xf32>
    %72 = vector.shape_cast %71 : vector<1x128x128xf32> to vector<128x128xf32>
    %cst_45 = arith.constant dense<0.000000e+00> : vector<2x128xf32>
    %73 = tpu.matmul %70, %72, %cst_45 {dimension_numbers = #tpu.dot_dimension_numbers<[1], [0], [0], [1], [0, 0, 1, 1], [], []>} : vector<2x128xf32>, vector<128x128xf32>, vector<2x128xf32> -> vector<2x128xf32>
    %c0_46 = arith.constant 0 : index
    %c0_47 = arith.constant 0 : index
    %c0_48 = arith.constant 0 : index
    %74 = vector.load %arg4[%c0_46, %c0_47, %c0_48] : memref<8x1x128xf32, #tpu.memory_space<vmem>>, vector<1x1x128xf32>
    %75 = vector.shape_cast %74 : vector<1x1x128xf32> to vector<1x128xf32>
    %76 = vector.broadcast %75 : vector<1x128xf32> to vector<2x128xf32>
    %77 = arith.addf %73, %76 : vector<2x128xf32>
    %c0_49 = arith.constant 0 : index
    %c0_50 = arith.constant 0 : index
    %c0_51 = arith.constant 0 : index
    %78 = vector.load %arg6[%c0_49, %c0_50, %c0_51] : memref<8x2x128xf32, #tpu.memory_space<vmem>>, vector<1x2x128xf32>
    %79 = vector.shape_cast %78 : vector<1x2x128xf32> to vector<2x128xf32>
    %80 = vector.shape_cast %77 : vector<2x128xf32> to vector<1x2x128xf32>
    tpu.vector_store %arg6[%c0_49, %c0_50, %c0_51], %80 {strides = array<i32>} : memref<8x2x128xf32, #tpu.memory_space<vmem>>, vector<1x2x128xf32>,
    %81 = vector.extract_strided_slice %68 {offsets = [0, 1, 0], sizes = [2, 1, 128], strides = [1, 1, 1]} : vector<2x8x128xf32> to vector<2x1x128xf32>
    %82 = vector.shape_cast %81 : vector<2x1x128xf32> to vector<2x128xf32>
    %c1_52 = arith.constant 1 : index
    %c0_53 = arith.constant 0 : index
    %c0_54 = arith.constant 0 : index
    %83 = vector.load %arg3[%c1_52, %c0_53, %c0_54] : memref<8x128x128xf32, #tpu.memory_space<vmem>>, vector<1x128x128xf32>
    %84 = vector.shape_cast %83 : vector<1x128x128xf32> to vector<128x128xf32>
    %cst_55 = arith.constant dense<0.000000e+00> : vector<2x128xf32>
    %85 = tpu.matmul %82, %84, %cst_55 {dimension_numbers = #tpu.dot_dimension_numbers<[1], [0], [0], [1], [0, 0, 1, 1], [], []>} : vector<2x128xf32>, vector<128x128xf32>, vector<2x128xf32> -> vector<2x128xf32>
    %c1_56 = arith.constant 1 : index
    %c0_57 = arith.constant 0 : index
    %c0_58 = arith.constant 0 : index
    %86 = vector.load %arg4[%c1_56, %c0_57, %c0_58] : memref<8x1x128xf32, #tpu.memory_space<vmem>>, vector<1x1x128xf32>
    %87 = vector.shape_cast %86 : vector<1x1x128xf32> to vector<1x128xf32>
    %88 = vector.broadcast %87 : vector<1x128xf32> to vector<2x128xf32>
    %89 = arith.addf %85, %88 : vector<2x128xf32>
    %c1_59 = arith.constant 1 : index
    %c0_60 = arith.constant 0 : index
    %c0_61 = arith.constant 0 : index
    %90 = vector.load %arg6[%c1_59, %c0_60, %c0_61] : memref<8x2x128xf32, #tpu.memory_space<vmem>>, vector<1x2x128xf32>
    %91 = vector.shape_cast %90 : vector<1x2x128xf32> to vector<2x128xf32>
    %92 = vector.shape_cast %89 : vector<2x128xf32> to vector<1x2x128xf32>
    tpu.vector_store %arg6[%c1_59, %c0_60, %c0_61], %92 {strides = array<i32>} : memref<8x2x128xf32, #tpu.memory_space<vmem>>, vector<1x2x128xf32>,
    %93 = vector.extract_strided_slice %68 {offsets = [0, 2, 0], sizes = [2, 1, 128], strides = [1, 1, 1]} : vector<2x8x128xf32> to vector<2x1x128xf32>
    %94 = vector.shape_cast %93 : vector<2x1x128xf32> to vector<2x128xf32>
    %c2_62 = arith.constant 2 : index
    %c0_63 = arith.constant 0 : index
    %c0_64 = arith.constant 0 : index
    %95 = vector.load %arg3[%c2_62, %c0_63, %c0_64] : memref<8x128x128xf32, #tpu.memory_space<vmem>>, vector<1x128x128xf32>
    %96 = vector.shape_cast %95 : vector<1x128x128xf32> to vector<128x128xf32>
    %cst_65 = arith.constant dense<0.000000e+00> : vector<2x128xf32>
    %97 = tpu.matmul %94, %96, %cst_65 {dimension_numbers = #tpu.dot_dimension_numbers<[1], [0], [0], [1], [0, 0, 1, 1], [], []>} : vector<2x128xf32>, vector<128x128xf32>, vector<2x128xf32> -> vector<2x128xf32>
    %c2_66 = arith.constant 2 : index
    %c0_67 = arith.constant 0 : index
    %c0_68 = arith.constant 0 : index
    %98 = vector.load %arg4[%c2_66, %c0_67, %c0_68] : memref<8x1x128xf32, #tpu.memory_space<vmem>>, vector<1x1x128xf32>
    %99 = vector.shape_cast %98 : vector<1x1x128xf32> to vector<1x128xf32>
    %100 = vector.broadcast %99 : vector<1x128xf32> to vector<2x128xf32>
    %101 = arith.addf %97, %100 : vector<2x128xf32>
    %c2_69 = arith.constant 2 : index
    %c0_70 = arith.constant 0 : index
    %c0_71 = arith.constant 0 : index
    %102 = vector.load %arg6[%c2_69, %c0_70, %c0_71] : memref<8x2x128xf32, #tpu.memory_space<vmem>>, vector<1x2x128xf32>
    %103 = vector.shape_cast %102 : vector<1x2x128xf32> to vector<2x128xf32>
    %104 = vector.shape_cast %101 : vector<2x128xf32> to vector<1x2x128xf32>
    tpu.vector_store %arg6[%c2_69, %c0_70, %c0_71], %104 {strides = array<i32>} : memref<8x2x128xf32, #tpu.memory_space<vmem>>, vector<1x2x128xf32>,
    %105 = vector.extract_strided_slice %68 {offsets = [0, 3, 0], sizes = [2, 1, 128], strides = [1, 1, 1]} : vector<2x8x128xf32> to vector<2x1x128xf32>
    %106 = vector.shape_cast %105 : vector<2x1x128xf32> to vector<2x128xf32>
    %c3_72 = arith.constant 3 : index
    %c0_73 = arith.constant 0 : index
    %c0_74 = arith.constant 0 : index
    %107 = vector.load %arg3[%c3_72, %c0_73, %c0_74] : memref<8x128x128xf32, #tpu.memory_space<vmem>>, vector<1x128x128xf32>
    %108 = vector.shape_cast %107 : vector<1x128x128xf32> to vector<128x128xf32>
    %cst_75 = arith.constant dense<0.000000e+00> : vector<2x128xf32>
    %109 = tpu.matmul %106, %108, %cst_75 {dimension_numbers = #tpu.dot_dimension_numbers<[1], [0], [0], [1], [0, 0, 1, 1], [], []>} : vector<2x128xf32>, vector<128x128xf32>, vector<2x128xf32> -> vector<2x128xf32>
    %c3_76 = arith.constant 3 : index
    %c0_77 = arith.constant 0 : index
    %c0_78 = arith.constant 0 : index
    %110 = vector.load %arg4[%c3_76, %c0_77, %c0_78] : memref<8x1x128xf32, #tpu.memory_space<vmem>>, vector<1x1x128xf32>
    %111 = vector.shape_cast %110 : vector<1x1x128xf32> to vector<1x128xf32>
    %112 = vector.broadcast %111 : vector<1x128xf32> to vector<2x128xf32>
    %113 = arith.addf %109, %112 : vector<2x128xf32>
    %c3_79 = arith.constant 3 : index
    %c0_80 = arith.constant 0 : index
    %c0_81 = arith.constant 0 : index
    %114 = vector.load %arg6[%c3_79, %c0_80, %c0_81] : memref<8x2x128xf32, #tpu.memory_space<vmem>>, vector<1x2x128xf32>
    %115 = vector.shape_cast %114 : vector<1x2x128xf32> to vector<2x128xf32>
    %116 = vector.shape_cast %113 : vector<2x128xf32> to vector<1x2x128xf32>
    tpu.vector_store %arg6[%c3_79, %c0_80, %c0_81], %116 {strides = array<i32>} : memref<8x2x128xf32, #tpu.memory_space<vmem>>, vector<1x2x128xf32>,
    %117 = vector.extract_strided_slice %68 {offsets = [0, 4, 0], sizes = [2, 1, 128], strides = [1, 1, 1]} : vector<2x8x128xf32> to vector<2x1x128xf32>
    %118 = vector.shape_cast %117 : vector<2x1x128xf32> to vector<2x128xf32>
    %c4 = arith.constant 4 : index
    %c0_82 = arith.constant 0 : index
    %c0_83 = arith.constant 0 : index
    %119 = vector.load %arg3[%c4, %c0_82, %c0_83] : memref<8x128x128xf32, #tpu.memory_space<vmem>>, vector<1x128x128xf32>
    %120 = vector.shape_cast %119 : vector<1x128x128xf32> to vector<128x128xf32>
    %cst_84 = arith.constant dense<0.000000e+00> : vector<2x128xf32>
    %121 = tpu.matmul %118, %120, %cst_84 {dimension_numbers = #tpu.dot_dimension_numbers<[1], [0], [0], [1], [0, 0, 1, 1], [], []>} : vector<2x128xf32>, vector<128x128xf32>, vector<2x128xf32> -> vector<2x128xf32>
    %c4_85 = arith.constant 4 : index
    %c0_86 = arith.constant 0 : index
    %c0_87 = arith.constant 0 : index
    %122 = vector.load %arg4[%c4_85, %c0_86, %c0_87] : memref<8x1x128xf32, #tpu.memory_space<vmem>>, vector<1x1x128xf32>
    %123 = vector.shape_cast %122 : vector<1x1x128xf32> to vector<1x128xf32>
    %124 = vector.broadcast %123 : vector<1x128xf32> to vector<2x128xf32>
    %125 = arith.addf %121, %124 : vector<2x128xf32>
    %c4_88 = arith.constant 4 : index
    %c0_89 = arith.constant 0 : index
    %c0_90 = arith.constant 0 : index
    %126 = vector.load %arg6[%c4_88, %c0_89, %c0_90] : memref<8x2x128xf32, #tpu.memory_space<vmem>>, vector<1x2x128xf32>
    %127 = vector.shape_cast %126 : vector<1x2x128xf32> to vector<2x128xf32>
    %128 = vector.shape_cast %125 : vector<2x128xf32> to vector<1x2x128xf32>
    tpu.vector_store %arg6[%c4_88, %c0_89, %c0_90], %128 {strides = array<i32>} : memref<8x2x128xf32, #tpu.memory_space<vmem>>, vector<1x2x128xf32>,
    %129 = vector.extract_strided_slice %68 {offsets = [0, 5, 0], sizes = [2, 1, 128], strides = [1, 1, 1]} : vector<2x8x128xf32> to vector<2x1x128xf32>
    %130 = vector.shape_cast %129 : vector<2x1x128xf32> to vector<2x128xf32>
    %c5 = arith.constant 5 : index
    %c0_91 = arith.constant 0 : index
    %c0_92 = arith.constant 0 : index
    %131 = vector.load %arg3[%c5, %c0_91, %c0_92] : memref<8x128x128xf32, #tpu.memory_space<vmem>>, vector<1x128x128xf32>
    %132 = vector.shape_cast %131 : vector<1x128x128xf32> to vector<128x128xf32>
    %cst_93 = arith.constant dense<0.000000e+00> : vector<2x128xf32>
    %133 = tpu.matmul %130, %132, %cst_93 {dimension_numbers = #tpu.dot_dimension_numbers<[1], [0], [0], [1], [0, 0, 1, 1], [], []>} : vector<2x128xf32>, vector<128x128xf32>, vector<2x128xf32> -> vector<2x128xf32>
    %c5_94 = arith.constant 5 : index
    %c0_95 = arith.constant 0 : index
    %c0_96 = arith.constant 0 : index
    %134 = vector.load %arg4[%c5_94, %c0_95, %c0_96] : memref<8x1x128xf32, #tpu.memory_space<vmem>>, vector<1x1x128xf32>
    %135 = vector.shape_cast %134 : vector<1x1x128xf32> to vector<1x128xf32>
    %136 = vector.broadcast %135 : vector<1x128xf32> to vector<2x128xf32>
    %137 = arith.addf %133, %136 : vector<2x128xf32>
    %c5_97 = arith.constant 5 : index
    %c0_98 = arith.constant 0 : index
    %c0_99 = arith.constant 0 : index
    %138 = vector.load %arg6[%c5_97, %c0_98, %c0_99] : memref<8x2x128xf32, #tpu.memory_space<vmem>>, vector<1x2x128xf32>
    %139 = vector.shape_cast %138 : vector<1x2x128xf32> to vector<2x128xf32>
    %140 = vector.shape_cast %137 : vector<2x128xf32> to vector<1x2x128xf32>
    tpu.vector_store %arg6[%c5_97, %c0_98, %c0_99], %140 {strides = array<i32>} : memref<8x2x128xf32, #tpu.memory_space<vmem>>, vector<1x2x128xf32>,
    %141 = vector.extract_strided_slice %68 {offsets = [0, 6, 0], sizes = [2, 1, 128], strides = [1, 1, 1]} : vector<2x8x128xf32> to vector<2x1x128xf32>
    %142 = vector.shape_cast %141 : vector<2x1x128xf32> to vector<2x128xf32>
    %c6 = arith.constant 6 : index
    %c0_100 = arith.constant 0 : index
    %c0_101 = arith.constant 0 : index
    %143 = vector.load %arg3[%c6, %c0_100, %c0_101] : memref<8x128x128xf32, #tpu.memory_space<vmem>>, vector<1x128x128xf32>
    %144 = vector.shape_cast %143 : vector<1x128x128xf32> to vector<128x128xf32>
    %cst_102 = arith.constant dense<0.000000e+00> : vector<2x128xf32>
    %145 = tpu.matmul %142, %144, %cst_102 {dimension_numbers = #tpu.dot_dimension_numbers<[1], [0], [0], [1], [0, 0, 1, 1], [], []>} : vector<2x128xf32>, vector<128x128xf32>, vector<2x128xf32> -> vector<2x128xf32>
    %c6_103 = arith.constant 6 : index
    %c0_104 = arith.constant 0 : index
    %c0_105 = arith.constant 0 : index
    %146 = vector.load %arg4[%c6_103, %c0_104, %c0_105] : memref<8x1x128xf32, #tpu.memory_space<vmem>>, vector<1x1x128xf32>
    %147 = vector.shape_cast %146 : vector<1x1x128xf32> to vector<1x128xf32>
    %148 = vector.broadcast %147 : vector<1x128xf32> to vector<2x128xf32>
    %149 = arith.addf %145, %148 : vector<2x128xf32>
    %c6_106 = arith.constant 6 : index
    %c0_107 = arith.constant 0 : index
    %c0_108 = arith.constant 0 : index
    %150 = vector.load %arg6[%c6_106, %c0_107, %c0_108] : memref<8x2x128xf32, #tpu.memory_space<vmem>>, vector<1x2x128xf32>
    %151 = vector.shape_cast %150 : vector<1x2x128xf32> to vector<2x128xf32>
    %152 = vector.shape_cast %149 : vector<2x128xf32> to vector<1x2x128xf32>
    tpu.vector_store %arg6[%c6_106, %c0_107, %c0_108], %152 {strides = array<i32>} : memref<8x2x128xf32, #tpu.memory_space<vmem>>, vector<1x2x128xf32>,
    %153 = vector.extract_strided_slice %68 {offsets = [0, 7, 0], sizes = [2, 1, 128], strides = [1, 1, 1]} : vector<2x8x128xf32> to vector<2x1x128xf32>
    %154 = vector.shape_cast %153 : vector<2x1x128xf32> to vector<2x128xf32>
    %c7 = arith.constant 7 : index
    %c0_109 = arith.constant 0 : index
    %c0_110 = arith.constant 0 : index
    %155 = vector.load %arg3[%c7, %c0_109, %c0_110] : memref<8x128x128xf32, #tpu.memory_space<vmem>>, vector<1x128x128xf32>
    %156 = vector.shape_cast %155 : vector<1x128x128xf32> to vector<128x128xf32>
    %cst_111 = arith.constant dense<0.000000e+00> : vector<2x128xf32>
    %157 = tpu.matmul %154, %156, %cst_111 {dimension_numbers = #tpu.dot_dimension_numbers<[1], [0], [0], [1], [0, 0, 1, 1], [], []>} : vector<2x128xf32>, vector<128x128xf32>, vector<2x128xf32> -> vector<2x128xf32>
    %c7_112 = arith.constant 7 : index
    %c0_113 = arith.constant 0 : index
    %c0_114 = arith.constant 0 : index
    %158 = vector.load %arg4[%c7_112, %c0_113, %c0_114] : memref<8x1x128xf32, #tpu.memory_space<vmem>>, vector<1x1x128xf32>
    %159 = vector.shape_cast %158 : vector<1x1x128xf32> to vector<1x128xf32>
    %160 = vector.broadcast %159 : vector<1x128xf32> to vector<2x128xf32>
    %161 = arith.addf %157, %160 : vector<2x128xf32>
    %c7_115 = arith.constant 7 : index
    %c0_116 = arith.constant 0 : index
    %c0_117 = arith.constant 0 : index
    %162 = vector.load %arg6[%c7_115, %c0_116, %c0_117] : memref<8x2x128xf32, #tpu.memory_space<vmem>>, vector<1x2x128xf32>
    %163 = vector.shape_cast %162 : vector<1x2x128xf32> to vector<2x128xf32>
    %164 = vector.shape_cast %161 : vector<2x128xf32> to vector<1x2x128xf32>
    tpu.vector_store %arg6[%c7_115, %c0_116, %c0_117], %164 {strides = array<i32>} : memref<8x2x128xf32, #tpu.memory_space<vmem>>, vector<1x2x128xf32>,
    return
  }
}

</mosaic_0001>

<llo_original>
// kernel: tpu_custom_call.1
$region0: #{tpu_custom_call.1}
  #allocation0 [shape = 'u32[]', space=smem, size = 0x4, offset = 0x4, fixed_abs, tag = 'smem constant byte address 0x4 - core index']
  #allocation1 [shape = 'u32[144,128]{1,0:T(1,128)}', space=vmem, size = 0x12000, scoped, tag = 'internal scratch']
  %s0 = inlined_call_operand.hbm [shape: f32[16,128], index: 0, kind: input, shape index: {}]
  %s1 = inlined_call_operand.hbm [shape: f32[4,128,128], index: 1, kind: input, shape index: {}]
  %s2 = inlined_call_operand.vmem [shape: f32[4,1,128], index: 2, kind: input, shape index: {}]
  %s3 = inlined_call_operand.hbm [shape: f32[8,128,128], index: 3, kind: input, shape index: {}]
  %s4 = inlined_call_operand.vmem [shape: f32[8,1,128], index: 4, kind: input, shape index: {}]
  %s5 = inlined_call_operand.hbm [shape: f32[16,128], index: 5, kind: output, shape index: {0}]
  %s6 = inlined_call_operand.hbm [shape: f32[8,2,128], index: 6, kind: output, shape index: {1}]
  %7 = xla_tuple %s5, %s6
  %s8 = sld [smem:[#allocation0]]
  $region50: #{tpu_custom_call.1} parent=0
    _
  %s10 = ssub.s32 1, %s8
  %s11 = scalar_select 0, %s10, %s8
  $region1: #{tpu_custom_call.1} parent=0
    #allocation2 [shape = 'u8[8192]{0}', space=vmem, size = 0x2000, scoped, tag = 'input window, operand 0, single buffered']
    #allocation3 [shape = 's32[1]{0}', space=sflag, size = 0x4, scoped, tag = 'scoped memory for tpu_custom_call.1']
    #allocation4 [shape = 's32[1]{0}', space=sflag, size = 0x4, scoped, tag = 'scoped memory for tpu_custom_call.1']
    #allocation5 [shape = 'u8[262144]{0}', space=vmem, size = 0x40000, scoped, tag = 'input window, operand 1, single buffered']
    #allocation6 [shape = 's32[1]{0}', space=sflag, size = 0x4, scoped, tag = 'scoped memory for tpu_custom_call.1']
    #allocation7 [shape = 'u8[524288]{0}', space=vmem, size = 0x80000, scoped, tag = 'input window, operand 3, single buffered']
    #allocation8 [shape = 'u8[8192]{0}', space=vmem, size = 0x2000, scoped, tag = 'output window, operand 0, single buffered']
    #allocation9 [shape = 'u8[8192]{0}', space=vmem, size = 0x2000, scoped, tag = 'output window, operand 1, single buffered']
    #allocation10 [shape = 's32[1]{0}', space=sflag, size = 0x4, scoped, tag = 'scoped memory for tpu_custom_call.1']
    %12 = vsyncpa [#allocation3], 0
    %13 = vsyncpa [#allocation6], 0
    %14 = vsyncpa [#allocation4], 0
    %15 = vsyncpa [#allocation10], 0
    // Predicated region
    $region2: #{tpu_custom_call.1} parent=1 // pred_check
      _
    $region3: #{tpu_custom_call.1} parent=1 // pred_check_branch
      %17 = sbr.rel (0) target = $region5
    $region4: #{tpu_custom_call.1} parent=1 // pred_region
      %s19 = ssub.s32 256, 256
      %20 = vsyncadd [#allocation3], %s19
      %s21 = sshll.u32 [#allocation2], 4
      %s22 = int_to_ptr.vmem [resolvable:$true] %s21
      %27 = dma.hbm_to_vmem [thread:$0]  %s0, 256, %s22, [#allocation3], 128, 128, 8
    $region5: #{tpu_custom_call.1} parent=1 // pred_fallthru
      _
    // Predicated region
    $region6: #{tpu_custom_call.1} parent=1 // pred_check
      _
    $region7: #{tpu_custom_call.1} parent=1 // pred_check_branch
      %29 = sbr.rel (0) target = $region9
    $region8: #{tpu_custom_call.1} parent=1 // pred_region
      %s31 = ssub.s32 8192, 8192
      %32 = vsyncadd [#allocation6], %s31
      %s33 = sshll.u32 [#allocation5], 4
      %s34 = int_to_ptr.vmem [resolvable:$true] %s33
      %39 = dma.hbm_to_vmem [thread:$0]  %s1, 8192, %s34, [#allocation6], 128, 128, 8
    $region9: #{tpu_custom_call.1} parent=1 // pred_fallthru
      _
    // Predicated region
    $region10: #{tpu_custom_call.1} parent=1 // pred_check
      _
    $region11: #{tpu_custom_call.1} parent=1 // pred_check_branch
      %41 = sbr.rel (0) target = $region13
    $region12: #{tpu_custom_call.1} parent=1 // pred_region
      _
    $region13: #{tpu_custom_call.1} parent=1 // pred_fallthru
      _
    // Predicated region
    $region14: #{tpu_custom_call.1} parent=1 // pred_check
      _
    $region15: #{tpu_custom_call.1} parent=1 // pred_check_branch
      %43 = sbr.rel (0) target = $region17
    $region16: #{tpu_custom_call.1} parent=1 // pred_region
      %s45 = ssub.s32 16384, 16384
      %46 = vsyncadd [#allocation6], %s45
      %s47 = sshll.u32 [#allocation7], 4
      %s48 = int_to_ptr.vmem [resolvable:$true] %s47
      %53 = dma.hbm_to_vmem [thread:$0]  %s3, 16384, %s48, [#allocation6], 128, 128, 8
    $region17: #{tpu_custom_call.1} parent=1 // pred_fallthru
      _
    // Predicated region
    $region18: #{tpu_custom_call.1} parent=1 // pred_check
      _
    $region19: #{tpu_custom_call.1} parent=1 // pred_check_branch
      %55 = sbr.rel (0) target = $region21
    $region20: #{tpu_custom_call.1} parent=1 // pred_region
      _
    $region21: #{tpu_custom_call.1} parent=1 // pred_fallthru
      _
    // Predicated region
    $region22: #{tpu_custom_call.1} parent=1 // pred_check
      _
    $region23: #{tpu_custom_call.1} parent=1 // pred_check_branch
      %57 = sbr.rel (0) target = $region25
    $region24: #{tpu_custom_call.1} parent=1 // pred_region
      %58 = dma.done [#allocation3], 256
    $region25: #{tpu_custom_call.1} parent=1 // pred_fallthru
      _
    // Predicated region
    $region26: #{tpu_custom_call.1} parent=1 // pred_check
      _
    $region27: #{tpu_custom_call.1} parent=1 // pred_check_branch
      %60 = sbr.rel (0) target = $region29
    $region28: #{tpu_custom_call.1} parent=1 // pred_region
      %61 = dma.done [#allocation6], 8192
    $region29: #{tpu_custom_call.1} parent=1 // pred_fallthru
      _
    // Predicated region
    $region30: #{tpu_custom_call.1} parent=1 // pred_check
      _
    $region31: #{tpu_custom_call.1} parent=1 // pred_check_branch
      %63 = sbr.rel (0) target = $region33
    $region32: #{tpu_custom_call.1} parent=1 // pred_region
      %64 = dma.done [#allocation6], 16384
    $region33: #{tpu_custom_call.1} parent=1 // pred_fallthru
      _
    %v65 = vld [vmem:[#allocation2] sm:$0xff]
    %v66 = vld [vmem:[#allocation2 + $0x8] sm:$0xff]
    %v67 = vmul.f32 %v65, %v65
    %v68 = vmul.f32 %v66, %v66
    %69 = vadd.xlane.f32.xlu0 %v67
    %v70 = vpop.xlane.xlu0 %69
    %71 = vadd.xlane.f32.xlu0 %v68
    %v72 = vpop.xlane.xlu0 %71
    %v73 = vrcp.pop 128.0
    %v74 = vmul.f32 %v70, %v73
    %v75 = vmul.f32 %v72, %v73
    %v76 = vadd.f32 %v74, 1e-08
    %v77 = vadd.f32 %v75, 1e-08
    %v78 = vrsqrt.pop %v76
    %v79 = vrsqrt.pop %v77
    %v80 = vmul.f32 %v65, %v78
    %v81 = vmul.f32 %v66, %v79
    %v82 = vld [vmem:[#allocation5] sm:$0xff]
    %v83 = vld [vmem:[#allocation5 + $0x8] sm:$0xff]
    %v84 = vld [vmem:[#allocation5 + $0x10] sm:$0xff]
    %v85 = vld [vmem:[#allocation5 + $0x18] sm:$0xff]
    %v86 = vld [vmem:[#allocation5 + $0x20] sm:$0xff]
    %v87 = vld [vmem:[#allocation5 + $0x28] sm:$0xff]
    %v88 = vld [vmem:[#allocation5 + $0x30] sm:$0xff]
    %v89 = vld [vmem:[#allocation5 + $0x38] sm:$0xff]
    %v90 = vld [vmem:[#allocation5 + $0x40] sm:$0xff]
    %v91 = vld [vmem:[#allocation5 + $0x48] sm:$0xff]
    %v92 = vld [vmem:[#allocation5 + $0x50] sm:$0xff]
    %v93 = vld [vmem:[#allocation5 + $0x58] sm:$0xff]
    %v94 = vld [vmem:[#allocation5 + $0x60] sm:$0xff]
    %v95 = vld [vmem:[#allocation5 + $0x68] sm:$0xff]
    %v96 = vld [vmem:[#allocation5 + $0x70] sm:$0xff]
    %v97 = vld [vmem:[#allocation5 + $0x78] sm:$0xff]
    %v98 = vld [vmem:[%s2] sm:$0x1]
    %v100 = vlaneseq
    %v101 = vshrl.u32 %v100, 7
    %v102 = vsub.s32 0, %v101
    %v103 = vrot.slane %v98, %v102
    %105 = vmatprep.subr.mxu0 0.0
    %106 = vmatpush1.msra.mxu0 %v82
    %107 = vmatprep.subr.mxu0 0.0
    %108 = vmatpush1.msra.mxu0 %v83
    %109 = vmatprep.subr.mxu0 0.0
    %110 = vmatpush1.msra.mxu0 %v84
    %111 = vmatprep.subr.mxu0 0.0
    %112 = vmatpush1.msra.mxu0 %v85
    %113 = vmatprep.subr.mxu0 0.0
    %114 = vmatpush1.msra.mxu0 %v86
    %115 = vmatprep.subr.mxu0 0.0
    %116 = vmatpush1.msra.mxu0 %v87
    %117 = vmatprep.subr.mxu0 0.0
    %118 = vmatpush1.msra.mxu0 %v88
    %119 = vmatprep.subr.mxu0 0.0
    %120 = vmatpush1.msra.mxu0 %v89
    %121 = vmatprep.subr.mxu0 0.0
    %122 = vmatpush1.msra.mxu0 %v90
    %123 = vmatprep.subr.mxu0 0.0
    %124 = vmatpush1.msra.mxu0 %v91
    %125 = vmatprep.subr.mxu0 0.0
    %126 = vmatpush1.msra.mxu0 %v92
    %127 = vmatprep.subr.mxu0 0.0
    %128 = vmatpush1.msra.mxu0 %v93
    %129 = vmatprep.subr.mxu0 0.0
    %130 = vmatpush1.msra.mxu0 %v94
    %131 = vmatprep.subr.mxu0 0.0
    %132 = vmatpush1.msra.mxu0 %v95
    %133 = vmatprep.subr.mxu0 0.0
    %134 = vmatpush1.msra.mxu0 %v96
    %135 = vmatprep.subr.mxu0 0.0
    %136 = vmatpush1.msra.mxu0 %v97
    %137 = vmatprep.subr.mxu0 0.0
    %138 = vmatpush1.msra.mxu0 0.0
    %139 = vmatprep.subr.mxu0 0.0
    %140 = vmatpush1.msra.mxu0 0.0
    %141 = vmatprep.subr.mxu0 0.0
    %142 = vmatpush1.msra.mxu0 0.0
    %143 = vmatprep.subr.mxu0 0.0
    %144 = vmatpush1.msra.mxu0 0.0
    %145 = vmatprep.subr.mxu0 0.0
    %146 = vmatpush1.msra.mxu0 0.0
    %147 = vmatprep.subr.mxu0 0.0
    %148 = vmatpush1.msra.mxu0 0.0
    %149 = vmatprep.subr.mxu0 0.0
    %150 = vmatpush1.msra.mxu0 0.0
    %151 = vmatprep.subr.mxu0 0.0
    %152 = vmatpush1.msra.mxu0 0.0
    %153 = vmatprep.subr.mxu0 0.0
    %154 = vmatpush1.msra.mxu0 0.0
    %155 = vmatprep.subr.mxu0 0.0
    %156 = vmatpush1.msra.mxu0 0.0
    %157 = vmatprep.subr.mxu0 0.0
    %158 = vmatpush1.msra.mxu0 0.0
    %159 = vmatprep.subr.mxu0 0.0
    %160 = vmatpush1.msra.mxu0 0.0
    %161 = vmatprep.subr.mxu0 0.0
    %162 = vmatpush1.msra.mxu0 0.0
    %163 = vmatprep.subr.mxu0 0.0
    %164 = vmatpush1.msra.mxu0 0.0
    %165 = vmatprep.subr.mxu0 0.0
    %166 = vmatpush1.msra.mxu0 0.0
    %167 = vmatprep.subr.mxu0 0.0
    %168 = vmatpush1.msra.mxu0 0.0
    %169 = vmatprep.mubr.f32.mxu0 0.0
    %170 = vmatmul.mubr.f32.gmra.mrb[0].mxu0 %v80
    %v171 = vpop.f32.mrb[0].mxu0
    %v172 = vadd.f32 %v103, %v171
    %v173 = vpop.f32.mrb[0].mxu0
    %174 = vmatprep.mubr.f32.mxu0 0.0
    %175 = vmatmul.mubr.f32.gmra.mrb[0].mxu0 %v81
    %v176 = vpop.f32.mrb[0].mxu0
    %v177 = vadd.f32 %v103, %v176
    %v178 = vpop.f32.mrb[0].mxu0
    %179 = vdwg.mxu0
    %vm180 = vcmp.ge.f32.partialorder %v172, 0.0
    %vm181 = vcmp.ge.f32.partialorder %v177, 0.0
    %v182 = vmul.f32 %v172, 0.2
    %v183 = vmul.f32 %v177, 0.2
    %v184 = vsel %vm180, %v172, %v182
    %v185 = vsel %vm181, %v177, %v183
    %v186 = vmul.f32 %v184, 1.4142135
    %v187 = vmul.f32 %v185, 1.4142135
    %s188 = scalar_lea.vmem [#allocation5], 128
    %v189 = vld [vmem:[%s188] sm:$0xff]
    %v190 = vld [vmem:[%s188 + $0x8] sm:$0xff]
    %v191 = vld [vmem:[%s188 + $0x10] sm:$0xff]
    %v192 = vld [vmem:[%s188 + $0x18] sm:$0xff]
    %v193 = vld [vmem:[%s188 + $0x20] sm:$0xff]
    %v194 = vld [vmem:[%s188 + $0x28] sm:$0xff]
    %v195 = vld [vmem:[%s188 + $0x30] sm:$0xff]
    %v196 = vld [vmem:[%s188 + $0x38] sm:$0xff]
    %v197 = vld [vmem:[%s188 + $0x40] sm:$0xff]
    %v198 = vld [vmem:[%s188 + $0x48] sm:$0xff]
    %v199 = vld [vmem:[%s188 + $0x50] sm:$0xff]
    %v200 = vld [vmem:[%s188 + $0x58] sm:$0xff]
    %v201 = vld [vmem:[%s188 + $0x60] sm:$0xff]
    %v202 = vld [vmem:[%s188 + $0x68] sm:$0xff]
    %v203 = vld [vmem:[%s188 + $0x70] sm:$0xff]
    %v204 = vld [vmem:[%s188 + $0x78] sm:$0xff]
    %s205 = scalar_lea.vmem %s2, 1
    %v206 = vld [vmem:[%s205] sm:$0x1]
    %v208 = vlaneseq
    %v209 = vshrl.u32 %v208, 7
    %v210 = vsub.s32 0, %v209
    %v211 = vrot.slane %v206, %v210
    %213 = vmatprep.subr.mxu0 0.0
    %214 = vmatpush1.msra.mxu0 %v189
    %215 = vmatprep.subr.mxu0 0.0
    %216 = vmatpush1.msra.mxu0 %v190
    %217 = vmatprep.subr.mxu0 0.0
    %218 = vmatpush1.msra.mxu0 %v191
    %219 = vmatprep.subr.mxu0 0.0
    %220 = vmatpush1.msra.mxu0 %v192
    %221 = vmatprep.subr.mxu0 0.0
    %222 = vmatpush1.msra.mxu0 %v193
    %223 = vmatprep.subr.mxu0 0.0
    %224 = vmatpush1.msra.mxu0 %v194
    %225 = vmatprep.subr.mxu0 0.0
    %226 = vmatpush1.msra.mxu0 %v195
    %227 = vmatprep.subr.mxu0 0.0
    %228 = vmatpush1.msra.mxu0 %v196
    %229 = vmatprep.subr.mxu0 0.0
    %230 = vmatpush1.msra.mxu0 %v197
    %231 = vmatprep.subr.mxu0 0.0
    %232 = vmatpush1.msra.mxu0 %v198
    %233 = vmatprep.subr.mxu0 0.0
    %234 = vmatpush1.msra.mxu0 %v199
    %235 = vmatprep.subr.mxu0 0.0
    %236 = vmatpush1.msra.mxu0 %v200
    %237 = vmatprep.subr.mxu0 0.0
    %238 = vmatpush1.msra.mxu0 %v201
    %239 = vmatprep.subr.mxu0 0.0
    %240 = vmatpush1.msra.mxu0 %v202
    %241 = vmatprep.subr.mxu0 0.0
    %242 = vmatpush1.msra.mxu0 %v203
    %243 = vmatprep.subr.mxu0 0.0
    %244 = vmatpush1.msra.mxu0 %v204
    %245 = vmatprep.subr.mxu0 0.0
    %246 = vmatpush1.msra.mxu0 0.0
    %247 = vmatprep.subr.mxu0 0.0
    %248 = vmatpush1.msra.mxu0 0.0
    %249 = vmatprep.subr.mxu0 0.0
    %250 = vmatpush1.msra.mxu0 0.0
    %251 = vmatprep.subr.mxu0 0.0
    %252 = vmatpush1.msra.mxu0 0.0
    %253 = vmatprep.subr.mxu0 0.0
    %254 = vmatpush1.msra.mxu0 0.0
    %255 = vmatprep.subr.mxu0 0.0
    %256 = vmatpush1.msra.mxu0 0.0
    %257 = vmatprep.subr.mxu0 0.0
    %258 = vmatpush1.msra.mxu0 0.0
    %259 = vmatprep.subr.mxu0 0.0
    %260 = vmatpush1.msra.mxu0 0.0
    %261 = vmatprep.subr.mxu0 0.0
    %262 = vmatpush1.msra.mxu0 0.0
    %263 = vmatprep.subr.mxu0 0.0
    %264 = vmatpush1.msra.mxu0 0.0
    %265 = vmatprep.subr.mxu0 0.0
    %266 = vmatpush1.msra.mxu0 0.0
    %267 = vmatprep.subr.mxu0 0.0
    %268 = vmatpush1.msra.mxu0 0.0
    %269 = vmatprep.subr.mxu0 0.0
    %270 = vmatpush1.msra.mxu0 0.0
    %271 = vmatprep.subr.mxu0 0.0
    %272 = vmatpush1.msra.mxu0 0.0
    %273 = vmatprep.subr.mxu0 0.0
    %274 = vmatpush1.msra.mxu0 0.0
    %275 = vmatprep.subr.mxu0 0.0
    %276 = vmatpush1.msra.mxu0 0.0
    %277 = vmatprep.mubr.f32.mxu0 0.0
    %278 = vmatmul.mubr.f32.gmra.mrb[0].mxu0 %v186
    %v279 = vpop.f32.mrb[0].mxu0
    %v280 = vadd.f32 %v211, %v279
    %v281 = vpop.f32.mrb[0].mxu0
    %282 = vmatprep.mubr.f32.mxu0 0.0
    %283 = vmatmul.mubr.f32.gmra.mrb[0].mxu0 %v187
    %v284 = vpop.f32.mrb[0].mxu0
    %v285 = vadd.f32 %v211, %v284
    %v286 = vpop.f32.mrb[0].mxu0
    %287 = vdwg.mxu0
    %vm288 = vcmp.ge.f32.partialorder %v280, 0.0
    %vm289 = vcmp.ge.f32.partialorder %v285, 0.0
    %v290 = vmul.f32 %v280, 0.2
    %v291 = vmul.f32 %v285, 0.2
    %v292 = vsel %vm288, %v280, %v290
    %v293 = vsel %vm289, %v285, %v291
    %v294 = vmul.f32 %v292, 1.4142135
    %v295 = vmul.f32 %v293, 1.4142135
    %s296 = scalar_lea.vmem [#allocation5], 256
    %v297 = vld [vmem:[%s296] sm:$0xff]
    %v298 = vld [vmem:[%s296 + $0x8] sm:$0xff]
    %v299 = vld [vmem:[%s296 + $0x10] sm:$0xff]
    %v300 = vld [vmem:[%s296 + $0x18] sm:$0xff]
    %v301 = vld [vmem:[%s296 + $0x20] sm:$0xff]
    %v302 = vld [vmem:[%s296 + $0x28] sm:$0xff]
    %v303 = vld [vmem:[%s296 + $0x30] sm:$0xff]
    %v304 = vld [vmem:[%s296 + $0x38] sm:$0xff]
    %v305 = vld [vmem:[%s296 + $0x40] sm:$0xff]
    %v306 = vld [vmem:[%s296 + $0x48] sm:$0xff]
    %v307 = vld [vmem:[%s296 + $0x50] sm:$0xff]
    %v308 = vld [vmem:[%s296 + $0x58] sm:$0xff]
    %v309 = vld [vmem:[%s296 + $0x60] sm:$0xff]
    %v310 = vld [vmem:[%s296 + $0x68] sm:$0xff]
    %v311 = vld [vmem:[%s296 + $0x70] sm:$0xff]
    %v312 = vld [vmem:[%s296 + $0x78] sm:$0xff]
    %s313 = scalar_lea.vmem %s2, 2
    %v314 = vld [vmem:[%s313] sm:$0x1]
    %v316 = vlaneseq
    %v317 = vshrl.u32 %v316, 7
    %v318 = vsub.s32 0, %v317
    %v319 = vrot.slane %v314, %v318
    %321 = vmatprep.subr.mxu0 0.0
    %322 = vmatpush1.msra.mxu0 %v297
    %323 = vmatprep.subr.mxu0 0.0
    %324 = vmatpush1.msra.mxu0 %v298
    %325 = vmatprep.subr.mxu0 0.0
    %326 = vmatpush1.msra.mxu0 %v299
    %327 = vmatprep.subr.mxu0 0.0
    %328 = vmatpush1.msra.mxu0 %v300
    %329 = vmatprep.subr.mxu0 0.0
    %330 = vmatpush1.msra.mxu0 %v301
    %331 = vmatprep.subr.mxu0 0.0
    %332 = vmatpush1.msra.mxu0 %v302
    %333 = vmatprep.subr.mxu0 0.0
    %334 = vmatpush1.msra.mxu0 %v303
    %335 = vmatprep.subr.mxu0 0.0
    %336 = vmatpush1.msra.mxu0 %v304
    %337 = vmatprep.subr.mxu0 0.0
    %338 = vmatpush1.msra.mxu0 %v305
    %339 = vmatprep.subr.mxu0 0.0
    %340 = vmatpush1.msra.mxu0 %v306
    %341 = vmatprep.subr.mxu0 0.0
    %342 = vmatpush1.msra.mxu0 %v307
    %343 = vmatprep.subr.mxu0 0.0
    %344 = vmatpush1.msra.mxu0 %v308
    %345 = vmatprep.subr.mxu0 0.0
    %346 = vmatpush1.msra.mxu0 %v309
    %347 = vmatprep.subr.mxu0 0.0
    %348 = vmatpush1.msra.mxu0 %v310
    %349 = vmatprep.subr.mxu0 0.0
    %350 = vmatpush1.msra.mxu0 %v311
    %351 = vmatprep.subr.mxu0 0.0
    %352 = vmatpush1.msra.mxu0 %v312
    %353 = vmatprep.subr.mxu0 0.0
    %354 = vmatpush1.msra.mxu0 0.0
    %355 = vmatprep.subr.mxu0 0.0
    %356 = vmatpush1.msra.mxu0 0.0
    %357 = vmatprep.subr.mxu0 0.0
    %358 = vmatpush1.msra.mxu0 0.0
    %359 = vmatprep.subr.mxu0 0.0
    %360 = vmatpush1.msra.mxu0 0.0
    %361 = vmatprep.subr.mxu0 0.0
    %362 = vmatpush1.msra.mxu0 0.0
    %363 = vmatprep.subr.mxu0 0.0
    %364 = vmatpush1.msra.mxu0 0.0
    %365 = vmatprep.subr.mxu0 0.0
    %366 = vmatpush1.msra.mxu0 0.0
    %367 = vmatprep.subr.mxu0 0.0
    %368 = vmatpush1.msra.mxu0 0.0
    %369 = vmatprep.subr.mxu0 0.0
    %370 = vmatpush1.msra.mxu0 0.0
    %371 = vmatprep.subr.mxu0 0.0
    %372 = vmatpush1.msra.mxu0 0.0
    %373 = vmatprep.subr.mxu0 0.0
    %374 = vmatpush1.msra.mxu0 0.0
    %375 = vmatprep.subr.mxu0 0.0
    %376 = vmatpush1.msra.mxu0 0.0
    %377 = vmatprep.subr.mxu0 0.0
    %378 = vmatpush1.msra.mxu0 0.0
    %379 = vmatprep.subr.mxu0 0.0
    %380 = vmatpush1.msra.mxu0 0.0
    %381 = vmatprep.subr.mxu0 0.0
    %382 = vmatpush1.msra.mxu0 0.0
    %383 = vmatprep.subr.mxu0 0.0
    %384 = vmatpush1.msra.mxu0 0.0
    %385 = vmatprep.mubr.f32.mxu0 0.0
    %386 = vmatmul.mubr.f32.gmra.mrb[0].mxu0 %v294
    %v387 = vpop.f32.mrb[0].mxu0
    %v388 = vadd.f32 %v319, %v387
    %v389 = vpop.f32.mrb[0].mxu0
    %390 = vmatprep.mubr.f32.mxu0 0.0
    %391 = vmatmul.mubr.f32.gmra.mrb[0].mxu0 %v295
    %v392 = vpop.f32.mrb[0].mxu0
    %v393 = vadd.f32 %v319, %v392
    %v394 = vpop.f32.mrb[0].mxu0
    %395 = vdwg.mxu0
    %vm396 = vcmp.ge.f32.partialorder %v388, 0.0
    %vm397 = vcmp.ge.f32.partialorder %v393, 0.0
    %v398 = vmul.f32 %v388, 0.2
    %v399 = vmul.f32 %v393, 0.2
    %v400 = vsel %vm396, %v388, %v398
    %v401 = vsel %vm397, %v393, %v399
    %v402 = vmul.f32 %v400, 1.4142135
    %v403 = vmul.f32 %v401, 1.4142135
    %s404 = scalar_lea.vmem [#allocation5], 384
    %v405 = vld [vmem:[%s404] sm:$0xff]
    %v406 = vld [vmem:[%s404 + $0x8] sm:$0xff]
    %v407 = vld [vmem:[%s404 + $0x10] sm:$0xff]
    %v408 = vld [vmem:[%s404 + $0x18] sm:$0xff]
    %v409 = vld [vmem:[%s404 + $0x20] sm:$0xff]
    %v410 = vld [vmem:[%s404 + $0x28] sm:$0xff]
    %v411 = vld [vmem:[%s404 + $0x30] sm:$0xff]
    %v412 = vld [vmem:[%s404 + $0x38] sm:$0xff]
    %v413 = vld [vmem:[%s404 + $0x40] sm:$0xff]
    %v414 = vld [vmem:[%s404 + $0x48] sm:$0xff]
    %v415 = vld [vmem:[%s404 + $0x50] sm:$0xff]
    %v416 = vld [vmem:[%s404 + $0x58] sm:$0xff]
    %v417 = vld [vmem:[%s404 + $0x60] sm:$0xff]
    %v418 = vld [vmem:[%s404 + $0x68] sm:$0xff]
    %v419 = vld [vmem:[%s404 + $0x70] sm:$0xff]
    %v420 = vld [vmem:[%s404 + $0x78] sm:$0xff]
    %s421 = scalar_lea.vmem %s2, 3
    %v422 = vld [vmem:[%s421] sm:$0x1]
    %v424 = vlaneseq
    %v425 = vshrl.u32 %v424, 7
    %v426 = vsub.s32 0, %v425
    %v427 = vrot.slane %v422, %v426
    %429 = vmatprep.subr.mxu0 0.0
    %430 = vmatpush1.msra.mxu0 %v405
    %431 = vmatprep.subr.mxu0 0.0
    %432 = vmatpush1.msra.mxu0 %v406
    %433 = vmatprep.subr.mxu0 0.0
    %434 = vmatpush1.msra.mxu0 %v407
    %435 = vmatprep.subr.mxu0 0.0
    %436 = vmatpush1.msra.mxu0 %v408
    %437 = vmatprep.subr.mxu0 0.0
    %438 = vmatpush1.msra.mxu0 %v409
    %439 = vmatprep.subr.mxu0 0.0
    %440 = vmatpush1.msra.mxu0 %v410
    %441 = vmatprep.subr.mxu0 0.0
    %442 = vmatpush1.msra.mxu0 %v411
    %443 = vmatprep.subr.mxu0 0.0
    %444 = vmatpush1.msra.mxu0 %v412
    %445 = vmatprep.subr.mxu0 0.0
    %446 = vmatpush1.msra.mxu0 %v413
    %447 = vmatprep.subr.mxu0 0.0
    %448 = vmatpush1.msra.mxu0 %v414
    %449 = vmatprep.subr.mxu0 0.0
    %450 = vmatpush1.msra.mxu0 %v415
    %451 = vmatprep.subr.mxu0 0.0
    %452 = vmatpush1.msra.mxu0 %v416
    %453 = vmatprep.subr.mxu0 0.0
    %454 = vmatpush1.msra.mxu0 %v417
    %455 = vmatprep.subr.mxu0 0.0
    %456 = vmatpush1.msra.mxu0 %v418
    %457 = vmatprep.subr.mxu0 0.0
    %458 = vmatpush1.msra.mxu0 %v419
    %459 = vmatprep.subr.mxu0 0.0
    %460 = vmatpush1.msra.mxu0 %v420
    %461 = vmatprep.subr.mxu0 0.0
    %462 = vmatpush1.msra.mxu0 0.0
    %463 = vmatprep.subr.mxu0 0.0
    %464 = vmatpush1.msra.mxu0 0.0
    %465 = vmatprep.subr.mxu0 0.0
    %466 = vmatpush1.msra.mxu0 0.0
    %467 = vmatprep.subr.mxu0 0.0
    %468 = vmatpush1.msra.mxu0 0.0
    %469 = vmatprep.subr.mxu0 0.0
    %470 = vmatpush1.msra.mxu0 0.0
    %471 = vmatprep.subr.mxu0 0.0
    %472 = vmatpush1.msra.mxu0 0.0
    %473 = vmatprep.subr.mxu0 0.0
    %474 = vmatpush1.msra.mxu0 0.0
    %475 = vmatprep.subr.mxu0 0.0
    %476 = vmatpush1.msra.mxu0 0.0
    %477 = vmatprep.subr.mxu0 0.0
    %478 = vmatpush1.msra.mxu0 0.0
    %479 = vmatprep.subr.mxu0 0.0
    %480 = vmatpush1.msra.mxu0 0.0
    %481 = vmatprep.subr.mxu0 0.0
    %482 = vmatpush1.msra.mxu0 0.0
    %483 = vmatprep.subr.mxu0 0.0
    %484 = vmatpush1.msra.mxu0 0.0
    %485 = vmatprep.subr.mxu0 0.0
    %486 = vmatpush1.msra.mxu0 0.0
    %487 = vmatprep.subr.mxu0 0.0
    %488 = vmatpush1.msra.mxu0 0.0
    %489 = vmatprep.subr.mxu0 0.0
    %490 = vmatpush1.msra.mxu0 0.0
    %491 = vmatprep.subr.mxu0 0.0
    %492 = vmatpush1.msra.mxu0 0.0
    %493 = vmatprep.mubr.f32.mxu0 0.0
    %494 = vmatmul.mubr.f32.gmra.mrb[0].mxu0 %v402
    %v495 = vpop.f32.mrb[0].mxu0
    %v496 = vadd.f32 %v427, %v495
    %v497 = vpop.f32.mrb[0].mxu0
    %498 = vmatprep.mubr.f32.mxu0 0.0
    %499 = vmatmul.mubr.f32.gmra.mrb[0].mxu0 %v403
    %v500 = vpop.f32.mrb[0].mxu0
    %v501 = vadd.f32 %v427, %v500
    %v502 = vpop.f32.mrb[0].mxu0
    %503 = vdwg.mxu0
    %vm504 = vcmp.ge.f32.partialorder %v496, 0.0
    %vm505 = vcmp.ge.f32.partialorder %v501, 0.0
    %v506 = vmul.f32 %v496, 0.2
    %v507 = vmul.f32 %v501, 0.2
    %v508 = vsel %vm504, %v496, %v506
    %v509 = vsel %vm505, %v501, %v507
    %v510 = vmul.f32 %v508, 1.4142135
    %v511 = vmul.f32 %v509, 1.4142135
    %512 = vst [vmem:[#allocation8] sm:$0xff] %v510
    %513 = vst [vmem:[#allocation8 + $0x8] sm:$0xff] %v511
    %v514 = vld [vmem:[#allocation7] sm:$0xff]
    %v515 = vld [vmem:[#allocation7 + $0x8] sm:$0xff]
    %v516 = vld [vmem:[#allocation7 + $0x10] sm:$0xff]
    %v517 = vld [vmem:[#allocation7 + $0x18] sm:$0xff]
    %v518 = vld [vmem:[#allocation7 + $0x20] sm:$0xff]
    %v519 = vld [vmem:[#allocation7 + $0x28] sm:$0xff]
    %v520 = vld [vmem:[#allocation7 + $0x30] sm:$0xff]
    %v521 = vld [vmem:[#allocation7 + $0x38] sm:$0xff]
    %v522 = vld [vmem:[#allocation7 + $0x40] sm:$0xff]
    %v523 = vld [vmem:[#allocation7 + $0x48] sm:$0xff]
    %v524 = vld [vmem:[#allocation7 + $0x50] sm:$0xff]
    %v525 = vld [vmem:[#allocation7 + $0x58] sm:$0xff]
    %v526 = vld [vmem:[#allocation7 + $0x60] sm:$0xff]
    %v527 = vld [vmem:[#allocation7 + $0x68] sm:$0xff]
    %v528 = vld [vmem:[#allocation7 + $0x70] sm:$0xff]
    %v529 = vld [vmem:[#allocation7 + $0x78] sm:$0xff]
    %v530 = vld [vmem:[%s4] sm:$0x1]
    %v532 = vlaneseq
    %v533 = vshrl.u32 %v532, 7
    %v534 = vsub.s32 0, %v533
    %v535 = vrot.slane %v530, %v534
    %v539 = vrot.slane %v511, 7
    %vm540 = vcmask 1041409
    %v541 = vsel %vm540, %v539, %v510
    %543 = vmatprep.subr.mxu0 0.0
    %544 = vmatpush1.msra.mxu0 %v514
    %545 = vmatprep.subr.mxu0 0.0
    %546 = vmatpush1.msra.mxu0 %v515
    %547 = vmatprep.subr.mxu0 0.0
    %548 = vmatpush1.msra.mxu0 %v516
    %549 = vmatprep.subr.mxu0 0.0
    %550 = vmatpush1.msra.mxu0 %v517
    %551 = vmatprep.subr.mxu0 0.0
    %552 = vmatpush1.msra.mxu0 %v518
    %553 = vmatprep.subr.mxu0 0.0
    %554 = vmatpush1.msra.mxu0 %v519
    %555 = vmatprep.subr.mxu0 0.0
    %556 = vmatpush1.msra.mxu0 %v520
    %557 = vmatprep.subr.mxu0 0.0
    %558 = vmatpush1.msra.mxu0 %v521
    %559 = vmatprep.subr.mxu0 0.0
    %560 = vmatpush1.msra.mxu0 %v522
    %561 = vmatprep.subr.mxu0 0.0
    %562 = vmatpush1.msra.mxu0 %v523
    %563 = vmatprep.subr.mxu0 0.0
    %564 = vmatpush1.msra.mxu0 %v524
    %565 = vmatprep.subr.mxu0 0.0
    %566 = vmatpush1.msra.mxu0 %v525
    %567 = vmatprep.subr.mxu0 0.0
    %568 = vmatpush1.msra.mxu0 %v526
    %569 = vmatprep.subr.mxu0 0.0
    %570 = vmatpush1.msra.mxu0 %v527
    %571 = vmatprep.subr.mxu0 0.0
    %572 = vmatpush1.msra.mxu0 %v528
    %573 = vmatprep.subr.mxu0 0.0
    %574 = vmatpush1.msra.mxu0 %v529
    %575 = vmatprep.subr.mxu0 0.0
    %576 = vmatpush1.msra.mxu0 0.0
    %577 = vmatprep.subr.mxu0 0.0
    %578 = vmatpush1.msra.mxu0 0.0
    %579 = vmatprep.subr.mxu0 0.0
    %580 = vmatpush1.msra.mxu0 0.0
    %581 = vmatprep.subr.mxu0 0.0
    %582 = vmatpush1.msra.mxu0 0.0
    %583 = vmatprep.subr.mxu0 0.0
    %584 = vmatpush1.msra.mxu0 0.0
    %585 = vmatprep.subr.mxu0 0.0
    %586 = vmatpush1.msra.mxu0 0.0
    %587 = vmatprep.subr.mxu0 0.0
    %588 = vmatpush1.msra.mxu0 0.0
    %589 = vmatprep.subr.mxu0 0.0
    %590 = vmatpush1.msra.mxu0 0.0
    %591 = vmatprep.subr.mxu0 0.0
    %592 = vmatpush1.msra.mxu0 0.0
    %593 = vmatprep.subr.mxu0 0.0
    %594 = vmatpush1.msra.mxu0 0.0
    %595 = vmatprep.subr.mxu0 0.0
    %596 = vmatpush1.msra.mxu0 0.0
    %597 = vmatprep.subr.mxu0 0.0
    %598 = vmatpush1.msra.mxu0 0.0
    %599 = vmatprep.subr.mxu0 0.0
    %600 = vmatpush1.msra.mxu0 0.0
    %601 = vmatprep.subr.mxu0 0.0
    %602 = vmatpush1.msra.mxu0 0.0
    %603 = vmatprep.subr.mxu0 0.0
    %604 = vmatpush1.msra.mxu0 0.0
    %605 = vmatprep.subr.mxu0 0.0
    %606 = vmatpush1.msra.mxu0 0.0
    %607 = vmatprep.mubr.f32.mxu0 0.0
    %608 = vmatmul.mubr.f32.gmra.mrb[0].mxu0 %v541
    %v609 = vpop.f32.mrb[0].mxu0
    %v610 = vadd.f32 %v535, %v609
    %v611 = vpop.f32.mrb[0].mxu0
    %612 = vdwg.mxu0
    %613 = vst [vmem:[#allocation9] sm:$0x3] %v610
    %s614 = scalar_lea.vmem [#allocation7], 128
    %v615 = vld [vmem:[%s614] sm:$0xff]
    %v616 = vld [vmem:[%s614 + $0x8] sm:$0xff]
    %v617 = vld [vmem:[%s614 + $0x10] sm:$0xff]
    %v618 = vld [vmem:[%s614 + $0x18] sm:$0xff]
    %v619 = vld [vmem:[%s614 + $0x20] sm:$0xff]
    %v620 = vld [vmem:[%s614 + $0x28] sm:$0xff]
    %v621 = vld [vmem:[%s614 + $0x30] sm:$0xff]
    %v622 = vld [vmem:[%s614 + $0x38] sm:$0xff]
    %v623 = vld [vmem:[%s614 + $0x40] sm:$0xff]
    %v624 = vld [vmem:[%s614 + $0x48] sm:$0xff]
    %v625 = vld [vmem:[%s614 + $0x50] sm:$0xff]
    %v626 = vld [vmem:[%s614 + $0x58] sm:$0xff]
    %v627 = vld [vmem:[%s614 + $0x60] sm:$0xff]
    %v628 = vld [vmem:[%s614 + $0x68] sm:$0xff]
    %v629 = vld [vmem:[%s614 + $0x70] sm:$0xff]
    %v630 = vld [vmem:[%s614 + $0x78] sm:$0xff]
    %s631 = scalar_lea.vmem %s4, 1
    %v632 = vld [vmem:[%s631] sm:$0x1]
    %v634 = vlaneseq
    %v635 = vshrl.u32 %v634, 7
    %v636 = vsub.s32 0, %v635
    %v637 = vrot.slane %v632, %v636
    %v639 = vrot.slane %v510, 1
    %v640 = vsel %vm540, %v511, %v639
    %642 = vmatprep.subr.mxu0 0.0
    %643 = vmatpush1.msra.mxu0 %v615
    %644 = vmatprep.subr.mxu0 0.0
    %645 = vmatpush1.msra.mxu0 %v616
    %646 = vmatprep.subr.mxu0 0.0
    %647 = vmatpush1.msra.mxu0 %v617
    %648 = vmatprep.subr.mxu0 0.0
    %649 = vmatpush1.msra.mxu0 %v618
    %650 = vmatprep.subr.mxu0 0.0
    %651 = vmatpush1.msra.mxu0 %v619
    %652 = vmatprep.subr.mxu0 0.0
    %653 = vmatpush1.msra.mxu0 %v620
    %654 = vmatprep.subr.mxu0 0.0
    %655 = vmatpush1.msra.mxu0 %v621
    %656 = vmatprep.subr.mxu0 0.0
    %657 = vmatpush1.msra.mxu0 %v622
    %658 = vmatprep.subr.mxu0 0.0
    %659 = vmatpush1.msra.mxu0 %v623
    %660 = vmatprep.subr.mxu0 0.0
    %661 = vmatpush1.msra.mxu0 %v624
    %662 = vmatprep.subr.mxu0 0.0
    %663 = vmatpush1.msra.mxu0 %v625
    %664 = vmatprep.subr.mxu0 0.0
    %665 = vmatpush1.msra.mxu0 %v626
    %666 = vmatprep.subr.mxu0 0.0
    %667 = vmatpush1.msra.mxu0 %v627
    %668 = vmatprep.subr.mxu0 0.0
    %669 = vmatpush1.msra.mxu0 %v628
    %670 = vmatprep.subr.mxu0 0.0
    %671 = vmatpush1.msra.mxu0 %v629
    %672 = vmatprep.subr.mxu0 0.0
    %673 = vmatpush1.msra.mxu0 %v630
    %674 = vmatprep.subr.mxu0 0.0
    %675 = vmatpush1.msra.mxu0 0.0
    %676 = vmatprep.subr.mxu0 0.0
    %677 = vmatpush1.msra.mxu0 0.0
    %678 = vmatprep.subr.mxu0 0.0
    %679 = vmatpush1.msra.mxu0 0.0
    %680 = vmatprep.subr.mxu0 0.0
    %681 = vmatpush1.msra.mxu0 0.0
    %682 = vmatprep.subr.mxu0 0.0
    %683 = vmatpush1.msra.mxu0 0.0
    %684 = vmatprep.subr.mxu0 0.0
    %685 = vmatpush1.msra.mxu0 0.0
    %686 = vmatprep.subr.mxu0 0.0
    %687 = vmatpush1.msra.mxu0 0.0
    %688 = vmatprep.subr.mxu0 0.0
    %689 = vmatpush1.msra.mxu0 0.0
    %690 = vmatprep.subr.mxu0 0.0
    %691 = vmatpush1.msra.mxu0 0.0
    %692 = vmatprep.subr.mxu0 0.0
    %693 = vmatpush1.msra.mxu0 0.0
    %694 = vmatprep.subr.mxu0 0.0
    %695 = vmatpush1.msra.mxu0 0.0
    %696 = vmatprep.subr.mxu0 0.0
    %697 = vmatpush1.msra.mxu0 0.0
    %698 = vmatprep.subr.mxu0 0.0
    %699 = vmatpush1.msra.mxu0 0.0
    %700 = vmatprep.subr.mxu0 0.0
    %701 = vmatpush1.msra.mxu0 0.0
    %702 = vmatprep.subr.mxu0 0.0
    %703 = vmatpush1.msra.mxu0 0.0
    %704 = vmatprep.subr.mxu0 0.0
    %705 = vmatpush1.msra.mxu0 0.0
    %706 = vmatprep.mubr.f32.mxu0 0.0
    %707 = vmatmul.mubr.f32.gmra.mrb[0].mxu0 %v640
    %v708 = vpop.f32.mrb[0].mxu0
    %v709 = vadd.f32 %v637, %v708
    %v710 = vpop.f32.mrb[0].mxu0
    %711 = vdwg.mxu0
    %s712 = scalar_lea.vmem [#allocation9], 2
    %713 = vst [vmem:[%s712] sm:$0x3] %v709
    %s714 = scalar_lea.vmem [#allocation7], 256
    %v715 = vld [vmem:[%s714] sm:$0xff]
    %v716 = vld [vmem:[%s714 + $0x8] sm:$0xff]
    %v717 = vld [vmem:[%s714 + $0x10] sm:$0xff]
    %v718 = vld [vmem:[%s714 + $0x18] sm:$0xff]
    %v719 = vld [vmem:[%s714 + $0x20] sm:$0xff]
    %v720 = vld [vmem:[%s714 + $0x28] sm:$0xff]
    %v721 = vld [vmem:[%s714 + $0x30] sm:$0xff]
    %v722 = vld [vmem:[%s714 + $0x38] sm:$0xff]
    %v723 = vld [vmem:[%s714 + $0x40] sm:$0xff]
    %v724 = vld [vmem:[%s714 + $0x48] sm:$0xff]
    %v725 = vld [vmem:[%s714 + $0x50] sm:$0xff]
    %v726 = vld [vmem:[%s714 + $0x58] sm:$0xff]
    %v727 = vld [vmem:[%s714 + $0x60] sm:$0xff]
    %v728 = vld [vmem:[%s714 + $0x68] sm:$0xff]
    %v729 = vld [vmem:[%s714 + $0x70] sm:$0xff]
    %v730 = vld [vmem:[%s714 + $0x78] sm:$0xff]
    %s731 = scalar_lea.vmem %s4, 2
    %v732 = vld [vmem:[%s731] sm:$0x1]
    %v734 = vlaneseq
    %v735 = vshrl.u32 %v734, 7
    %v736 = vsub.s32 0, %v735
    %v737 = vrot.slane %v732, %v736
    %v739 = vrot.slane %v510, 2
    %v740 = vrot.slane %v511, 1
    %v741 = vsel %vm540, %v740, %v739
    %743 = vmatprep.subr.mxu0 0.0
    %744 = vmatpush1.msra.mxu0 %v715
    %745 = vmatprep.subr.mxu0 0.0
    %746 = vmatpush1.msra.mxu0 %v716
    %747 = vmatprep.subr.mxu0 0.0
    %748 = vmatpush1.msra.mxu0 %v717
    %749 = vmatprep.subr.mxu0 0.0
    %750 = vmatpush1.msra.mxu0 %v718
    %751 = vmatprep.subr.mxu0 0.0
    %752 = vmatpush1.msra.mxu0 %v719
    %753 = vmatprep.subr.mxu0 0.0
    %754 = vmatpush1.msra.mxu0 %v720
    %755 = vmatprep.subr.mxu0 0.0
    %756 = vmatpush1.msra.mxu0 %v721
    %757 = vmatprep.subr.mxu0 0.0
    %758 = vmatpush1.msra.mxu0 %v722
    %759 = vmatprep.subr.mxu0 0.0
    %760 = vmatpush1.msra.mxu0 %v723
    %761 = vmatprep.subr.mxu0 0.0
    %762 = vmatpush1.msra.mxu0 %v724
    %763 = vmatprep.subr.mxu0 0.0
    %764 = vmatpush1.msra.mxu0 %v725
    %765 = vmatprep.subr.mxu0 0.0
    %766 = vmatpush1.msra.mxu0 %v726
    %767 = vmatprep.subr.mxu0 0.0
    %768 = vmatpush1.msra.mxu0 %v727
    %769 = vmatprep.subr.mxu0 0.0
    %770 = vmatpush1.msra.mxu0 %v728
    %771 = vmatprep.subr.mxu0 0.0
    %772 = vmatpush1.msra.mxu0 %v729
    %773 = vmatprep.subr.mxu0 0.0
    %774 = vmatpush1.msra.mxu0 %v730
    %775 = vmatprep.subr.mxu0 0.0
    %776 = vmatpush1.msra.mxu0 0.0
    %777 = vmatprep.subr.mxu0 0.0
    %778 = vmatpush1.msra.mxu0 0.0
    %779 = vmatprep.subr.mxu0 0.0
    %780 = vmatpush1.msra.mxu0 0.0
    %781 = vmatprep.subr.mxu0 0.0
    %782 = vmatpush1.msra.mxu0 0.0
    %783 = vmatprep.subr.mxu0 0.0
    %784 = vmatpush1.msra.mxu0 0.0
    %785 = vmatprep.subr.mxu0 0.0
    %786 = vmatpush1.msra.mxu0 0.0
    %787 = vmatprep.subr.mxu0 0.0
    %788 = vmatpush1.msra.mxu0 0.0
    %789 = vmatprep.subr.mxu0 0.0
    %790 = vmatpush1.msra.mxu0 0.0
    %791 = vmatprep.subr.mxu0 0.0
    %792 = vmatpush1.msra.mxu0 0.0
    %793 = vmatprep.subr.mxu0 0.0
    %794 = vmatpush1.msra.mxu0 0.0
    %795 = vmatprep.subr.mxu0 0.0
    %796 = vmatpush1.msra.mxu0 0.0
    %797 = vmatprep.subr.mxu0 0.0
    %798 = vmatpush1.msra.mxu0 0.0
    %799 = vmatprep.subr.mxu0 0.0
    %800 = vmatpush1.msra.mxu0 0.0
    %801 = vmatprep.subr.mxu0 0.0
    %802 = vmatpush1.msra.mxu0 0.0
    %803 = vmatprep.subr.mxu0 0.0
    %804 = vmatpush1.msra.mxu0 0.0
    %805 = vmatprep.subr.mxu0 0.0
    %806 = vmatpush1.msra.mxu0 0.0
    %807 = vmatprep.mubr.f32.mxu0 0.0
    %808 = vmatmul.mubr.f32.gmra.mrb[0].mxu0 %v741
    %v809 = vpop.f32.mrb[0].mxu0
    %v810 = vadd.f32 %v737, %v809
    %v811 = vpop.f32.mrb[0].mxu0
    %812 = vdwg.mxu0
    %s813 = scalar_lea.vmem [#allocation9], 4
    %814 = vst [vmem:[%s813] sm:$0x3] %v810
    %s815 = scalar_lea.vmem [#allocation7], 384
    %v816 = vld [vmem:[%s815] sm:$0xff]
    %v817 = vld [vmem:[%s815 + $0x8] sm:$0xff]
    %v818 = vld [vmem:[%s815 + $0x10] sm:$0xff]
    %v819 = vld [vmem:[%s815 + $0x18] sm:$0xff]
    %v820 = vld [vmem:[%s815 + $0x20] sm:$0xff]
    %v821 = vld [vmem:[%s815 + $0x28] sm:$0xff]
    %v822 = vld [vmem:[%s815 + $0x30] sm:$0xff]
    %v823 = vld [vmem:[%s815 + $0x38] sm:$0xff]
    %v824 = vld [vmem:[%s815 + $0x40] sm:$0xff]
    %v825 = vld [vmem:[%s815 + $0x48] sm:$0xff]
    %v826 = vld [vmem:[%s815 + $0x50] sm:$0xff]
    %v827 = vld [vmem:[%s815 + $0x58] sm:$0xff]
    %v828 = vld [vmem:[%s815 + $0x60] sm:$0xff]
    %v829 = vld [vmem:[%s815 + $0x68] sm:$0xff]
    %v830 = vld [vmem:[%s815 + $0x70] sm:$0xff]
    %v831 = vld [vmem:[%s815 + $0x78] sm:$0xff]
    %s832 = scalar_lea.vmem %s4, 3
    %v833 = vld [vmem:[%s832] sm:$0x1]
    %v835 = vlaneseq
    %v836 = vshrl.u32 %v835, 7
    %v837 = vsub.s32 0, %v836
    %v838 = vrot.slane %v833, %v837
    %v840 = vrot.slane %v510, 3
    %v841 = vrot.slane %v511, 2
    %v842 = vsel %vm540, %v841, %v840
    %844 = vmatprep.subr.mxu0 0.0
    %845 = vmatpush1.msra.mxu0 %v816
    %846 = vmatprep.subr.mxu0 0.0
    %847 = vmatpush1.msra.mxu0 %v817
    %848 = vmatprep.subr.mxu0 0.0
    %849 = vmatpush1.msra.mxu0 %v818
    %850 = vmatprep.subr.mxu0 0.0
    %851 = vmatpush1.msra.mxu0 %v819
    %852 = vmatprep.subr.mxu0 0.0
    %853 = vmatpush1.msra.mxu0 %v820
    %854 = vmatprep.subr.mxu0 0.0
    %855 = vmatpush1.msra.mxu0 %v821
    %856 = vmatprep.subr.mxu0 0.0
    %857 = vmatpush1.msra.mxu0 %v822
    %858 = vmatprep.subr.mxu0 0.0
    %859 = vmatpush1.msra.mxu0 %v823
    %860 = vmatprep.subr.mxu0 0.0
    %861 = vmatpush1.msra.mxu0 %v824
    %862 = vmatprep.subr.mxu0 0.0
    %863 = vmatpush1.msra.mxu0 %v825
    %864 = vmatprep.subr.mxu0 0.0
    %865 = vmatpush1.msra.mxu0 %v826
    %866 = vmatprep.subr.mxu0 0.0
    %867 = vmatpush1.msra.mxu0 %v827
    %868 = vmatprep.subr.mxu0 0.0
    %869 = vmatpush1.msra.mxu0 %v828
    %870 = vmatprep.subr.mxu0 0.0
    %871 = vmatpush1.msra.mxu0 %v829
    %872 = vmatprep.subr.mxu0 0.0
    %873 = vmatpush1.msra.mxu0 %v830
    %874 = vmatprep.subr.mxu0 0.0
    %875 = vmatpush1.msra.mxu0 %v831
    %876 = vmatprep.subr.mxu0 0.0
    %877 = vmatpush1.msra.mxu0 0.0
    %878 = vmatprep.subr.mxu0 0.0
    %879 = vmatpush1.msra.mxu0 0.0
    %880 = vmatprep.subr.mxu0 0.0
    %881 = vmatpush1.msra.mxu0 0.0
    %882 = vmatprep.subr.mxu0 0.0
    %883 = vmatpush1.msra.mxu0 0.0
    %884 = vmatprep.subr.mxu0 0.0
    %885 = vmatpush1.msra.mxu0 0.0
    %886 = vmatprep.subr.mxu0 0.0
    %887 = vmatpush1.msra.mxu0 0.0
    %888 = vmatprep.subr.mxu0 0.0
    %889 = vmatpush1.msra.mxu0 0.0
    %890 = vmatprep.subr.mxu0 0.0
    %891 = vmatpush1.msra.mxu0 0.0
    %892 = vmatprep.subr.mxu0 0.0
    %893 = vmatpush1.msra.mxu0 0.0
    %894 = vmatprep.subr.mxu0 0.0
    %895 = vmatpush1.msra.mxu0 0.0
    %896 = vmatprep.subr.mxu0 0.0
    %897 = vmatpush1.msra.mxu0 0.0
    %898 = vmatprep.subr.mxu0 0.0
    %899 = vmatpush1.msra.mxu0 0.0
    %900 = vmatprep.subr.mxu0 0.0
    %901 = vmatpush1.msra.mxu0 0.0
    %902 = vmatprep.subr.mxu0 0.0
    %903 = vmatpush1.msra.mxu0 0.0
    %904 = vmatprep.subr.mxu0 0.0
    %905 = vmatpush1.msra.mxu0 0.0
    %906 = vmatprep.subr.mxu0 0.0
    %907 = vmatpush1.msra.mxu0 0.0
    %908 = vmatprep.mubr.f32.mxu0 0.0
    %909 = vmatmul.mubr.f32.gmra.mrb[0].mxu0 %v842
    %v910 = vpop.f32.mrb[0].mxu0
    %v911 = vadd.f32 %v838, %v910
    %v912 = vpop.f32.mrb[0].mxu0
    %913 = vdwg.mxu0
    %s914 = scalar_lea.vmem [#allocation9], 6
    %915 = vst [vmem:[%s914] sm:$0x3] %v911
    %s916 = scalar_lea.vmem [#allocation7], 512
    %v917 = vld [vmem:[%s916] sm:$0xff]
    %v918 = vld [vmem:[%s916 + $0x8] sm:$0xff]
    %v919 = vld [vmem:[%s916 + $0x10] sm:$0xff]
    %v920 = vld [vmem:[%s916 + $0x18] sm:$0xff]
    %v921 = vld [vmem:[%s916 + $0x20] sm:$0xff]
    %v922 = vld [vmem:[%s916 + $0x28] sm:$0xff]
    %v923 = vld [vmem:[%s916 + $0x30] sm:$0xff]
    %v924 = vld [vmem:[%s916 + $0x38] sm:$0xff]
    %v925 = vld [vmem:[%s916 + $0x40] sm:$0xff]
    %v926 = vld [vmem:[%s916 + $0x48] sm:$0xff]
    %v927 = vld [vmem:[%s916 + $0x50] sm:$0xff]
    %v928 = vld [vmem:[%s916 + $0x58] sm:$0xff]
    %v929 = vld [vmem:[%s916 + $0x60] sm:$0xff]
    %v930 = vld [vmem:[%s916 + $0x68] sm:$0xff]
    %v931 = vld [vmem:[%s916 + $0x70] sm:$0xff]
    %v932 = vld [vmem:[%s916 + $0x78] sm:$0xff]
    %s933 = scalar_lea.vmem %s4, 4
    %v934 = vld [vmem:[%s933] sm:$0x1]
    %v936 = vlaneseq
    %v937 = vshrl.u32 %v936, 7
    %v938 = vsub.s32 0, %v937
    %v939 = vrot.slane %v934, %v938
    %v941 = vrot.slane %v510, 4
    %v942 = vrot.slane %v511, 3
    %v943 = vsel %vm540, %v942, %v941
    %945 = vmatprep.subr.mxu0 0.0
    %946 = vmatpush1.msra.mxu0 %v917
    %947 = vmatprep.subr.mxu0 0.0
    %948 = vmatpush1.msra.mxu0 %v918
    %949 = vmatprep.subr.mxu0 0.0
    %950 = vmatpush1.msra.mxu0 %v919
    %951 = vmatprep.subr.mxu0 0.0
    %952 = vmatpush1.msra.mxu0 %v920
    %953 = vmatprep.subr.mxu0 0.0
    %954 = vmatpush1.msra.mxu0 %v921
    %955 = vmatprep.subr.mxu0 0.0
    %956 = vmatpush1.msra.mxu0 %v922
    %957 = vmatprep.subr.mxu0 0.0
    %958 = vmatpush1.msra.mxu0 %v923
    %959 = vmatprep.subr.mxu0 0.0
    %960 = vmatpush1.msra.mxu0 %v924
    %961 = vmatprep.subr.mxu0 0.0
    %962 = vmatpush1.msra.mxu0 %v925
    %963 = vmatprep.subr.mxu0 0.0
    %964 = vmatpush1.msra.mxu0 %v926
    %965 = vmatprep.subr.mxu0 0.0
    %966 = vmatpush1.msra.mxu0 %v927
    %967 = vmatprep.subr.mxu0 0.0
    %968 = vmatpush1.msra.mxu0 %v928
    %969 = vmatprep.subr.mxu0 0.0
    %970 = vmatpush1.msra.mxu0 %v929
    %971 = vmatprep.subr.mxu0 0.0
    %972 = vmatpush1.msra.mxu0 %v930
    %973 = vmatprep.subr.mxu0 0.0
    %974 = vmatpush1.msra.mxu0 %v931
    %975 = vmatprep.subr.mxu0 0.0
    %976 = vmatpush1.msra.mxu0 %v932
    %977 = vmatprep.subr.mxu0 0.0
    %978 = vmatpush1.msra.mxu0 0.0
    %979 = vmatprep.subr.mxu0 0.0
    %980 = vmatpush1.msra.mxu0 0.0
    %981 = vmatprep.subr.mxu0 0.0
    %982 = vmatpush1.msra.mxu0 0.0
    %983 = vmatprep.subr.mxu0 0.0
    %984 = vmatpush1.msra.mxu0 0.0
    %985 = vmatprep.subr.mxu0 0.0
    %986 = vmatpush1.msra.mxu0 0.0
    %987 = vmatprep.subr.mxu0 0.0
    %988 = vmatpush1.msra.mxu0 0.0
    %989 = vmatprep.subr.mxu0 0.0
    %990 = vmatpush1.msra.mxu0 0.0
    %991 = vmatprep.subr.mxu0 0.0
    %992 = vmatpush1.msra.mxu0 0.0
    %993 = vmatprep.subr.mxu0 0.0
    %994 = vmatpush1.msra.mxu0 0.0
    %995 = vmatprep.subr.mxu0 0.0
    %996 = vmatpush1.msra.mxu0 0.0
    %997 = vmatprep.subr.mxu0 0.0
    %998 = vmatpush1.msra.mxu0 0.0
    %999 = vmatprep.subr.mxu0 0.0
    %1000 = vmatpush1.msra.mxu0 0.0
    %1001 = vmatprep.subr.mxu0 0.0
    %1002 = vmatpush1.msra.mxu0 0.0
    %1003 = vmatprep.subr.mxu0 0.0
    %1004 = vmatpush1.msra.mxu0 0.0
    %1005 = vmatprep.subr.mxu0 0.0
    %1006 = vmatpush1.msra.mxu0 0.0
    %1007 = vmatprep.subr.mxu0 0.0
    %1008 = vmatpush1.msra.mxu0 0.0
    %1009 = vmatprep.mubr.f32.mxu0 0.0
    %1010 = vmatmul.mubr.f32.gmra.mrb[0].mxu0 %v943
    %v1011 = vpop.f32.mrb[0].mxu0
    %v1012 = vadd.f32 %v939, %v1011
    %v1013 = vpop.f32.mrb[0].mxu0
    %1014 = vdwg.mxu0
    %s1015 = scalar_lea.vmem [#allocation9], 8
    %1016 = vst [vmem:[%s1015] sm:$0x3] %v1012
    %s1017 = scalar_lea.vmem [#allocation7], 640
    %v1018 = vld [vmem:[%s1017] sm:$0xff]
    %v1019 = vld [vmem:[%s1017 + $0x8] sm:$0xff]
    %v1020 = vld [vmem:[%s1017 + $0x10] sm:$0xff]
    %v1021 = vld [vmem:[%s1017 + $0x18] sm:$0xff]
    %v1022 = vld [vmem:[%s1017 + $0x20] sm:$0xff]
    %v1023 = vld [vmem:[%s1017 + $0x28] sm:$0xff]
    %v1024 = vld [vmem:[%s1017 + $0x30] sm:$0xff]
    %v1025 = vld [vmem:[%s1017 + $0x38] sm:$0xff]
    %v1026 = vld [vmem:[%s1017 + $0x40] sm:$0xff]
    %v1027 = vld [vmem:[%s1017 + $0x48] sm:$0xff]
    %v1028 = vld [vmem:[%s1017 + $0x50] sm:$0xff]
    %v1029 = vld [vmem:[%s1017 + $0x58] sm:$0xff]
    %v1030 = vld [vmem:[%s1017 + $0x60] sm:$0xff]
    %v1031 = vld [vmem:[%s1017 + $0x68] sm:$0xff]
    %v1032 = vld [vmem:[%s1017 + $0x70] sm:$0xff]
    %v1033 = vld [vmem:[%s1017 + $0x78] sm:$0xff]
    %s1034 = scalar_lea.vmem %s4, 5
    %v1035 = vld [vmem:[%s1034] sm:$0x1]
    %v1037 = vlaneseq
    %v1038 = vshrl.u32 %v1037, 7
    %v1039 = vsub.s32 0, %v1038
    %v1040 = vrot.slane %v1035, %v1039
    %v1042 = vrot.slane %v510, 5
    %v1043 = vrot.slane %v511, 4
    %v1044 = vsel %vm540, %v1043, %v1042
    %1046 = vmatprep.subr.mxu0 0.0
    %1047 = vmatpush1.msra.mxu0 %v1018
    %1048 = vmatprep.subr.mxu0 0.0
    %1049 = vmatpush1.msra.mxu0 %v1019
    %1050 = vmatprep.subr.mxu0 0.0
    %1051 = vmatpush1.msra.mxu0 %v1020
    %1052 = vmatprep.subr.mxu0 0.0
    %1053 = vmatpush1.msra.mxu0 %v1021
    %1054 = vmatprep.subr.mxu0 0.0
    %1055 = vmatpush1.msra.mxu0 %v1022
    %1056 = vmatprep.subr.mxu0 0.0
    %1057 = vmatpush1.msra.mxu0 %v1023
    %1058 = vmatprep.subr.mxu0 0.0
    %1059 = vmatpush1.msra.mxu0 %v1024
    %1060 = vmatprep.subr.mxu0 0.0
    %1061 = vmatpush1.msra.mxu0 %v1025
    %1062 = vmatprep.subr.mxu0 0.0
    %1063 = vmatpush1.msra.mxu0 %v1026
    %1064 = vmatprep.subr.mxu0 0.0
    %1065 = vmatpush1.msra.mxu0 %v1027
    %1066 = vmatprep.subr.mxu0 0.0
    %1067 = vmatpush1.msra.mxu0 %v1028
    %1068 = vmatprep.subr.mxu0 0.0
    %1069 = vmatpush1.msra.mxu0 %v1029
    %1070 = vmatprep.subr.mxu0 0.0
    %1071 = vmatpush1.msra.mxu0 %v1030
    %1072 = vmatprep.subr.mxu0 0.0
    %1073 = vmatpush1.msra.mxu0 %v1031
    %1074 = vmatprep.subr.mxu0 0.0
    %1075 = vmatpush1.msra.mxu0 %v1032
    %1076 = vmatprep.subr.mxu0 0.0
    %1077 = vmatpush1.msra.mxu0 %v1033
    %1078 = vmatprep.subr.mxu0 0.0
    %1079 = vmatpush1.msra.mxu0 0.0
    %1080 = vmatprep.subr.mxu0 0.0
    %1081 = vmatpush1.msra.mxu0 0.0
    %1082 = vmatprep.subr.mxu0 0.0
    %1083 = vmatpush1.msra.mxu0 0.0
    %1084 = vmatprep.subr.mxu0 0.0
    %1085 = vmatpush1.msra.mxu0 0.0
    %1086 = vmatprep.subr.mxu0 0.0
    %1087 = vmatpush1.msra.mxu0 0.0
    %1088 = vmatprep.subr.mxu0 0.0
    %1089 = vmatpush1.msra.mxu0 0.0
    %1090 = vmatprep.subr.mxu0 0.0
    %1091 = vmatpush1.msra.mxu0 0.0
    %1092 = vmatprep.subr.mxu0 0.0
    %1093 = vmatpush1.msra.mxu0 0.0
    %1094 = vmatprep.subr.mxu0 0.0
    %1095 = vmatpush1.msra.mxu0 0.0
    %1096 = vmatprep.subr.mxu0 0.0
    %1097 = vmatpush1.msra.mxu0 0.0
    %1098 = vmatprep.subr.mxu0 0.0
    %1099 = vmatpush1.msra.mxu0 0.0
    %1100 = vmatprep.subr.mxu0 0.0
    %1101 = vmatpush1.msra.mxu0 0.0
    %1102 = vmatprep.subr.mxu0 0.0
    %1103 = vmatpush1.msra.mxu0 0.0
    %1104 = vmatprep.subr.mxu0 0.0
    %1105 = vmatpush1.msra.mxu0 0.0
    %1106 = vmatprep.subr.mxu0 0.0
    %1107 = vmatpush1.msra.mxu0 0.0
    %1108 = vmatprep.subr.mxu0 0.0
    %1109 = vmatpush1.msra.mxu0 0.0
    %1110 = vmatprep.mubr.f32.mxu0 0.0
    %1111 = vmatmul.mubr.f32.gmra.mrb[0].mxu0 %v1044
    %v1112 = vpop.f32.mrb[0].mxu0
    %v1113 = vadd.f32 %v1040, %v1112
    %v1114 = vpop.f32.mrb[0].mxu0
    %1115 = vdwg.mxu0
    %s1116 = scalar_lea.vmem [#allocation9], 10
    %1117 = vst [vmem:[%s1116] sm:$0x3] %v1113
    %s1118 = scalar_lea.vmem [#allocation7], 768
    %v1119 = vld [vmem:[%s1118] sm:$0xff]
    %v1120 = vld [vmem:[%s1118 + $0x8] sm:$0xff]
    %v1121 = vld [vmem:[%s1118 + $0x10] sm:$0xff]
    %v1122 = vld [vmem:[%s1118 + $0x18] sm:$0xff]
    %v1123 = vld [vmem:[%s1118 + $0x20] sm:$0xff]
    %v1124 = vld [vmem:[%s1118 + $0x28] sm:$0xff]
    %v1125 = vld [vmem:[%s1118 + $0x30] sm:$0xff]
    %v1126 = vld [vmem:[%s1118 + $0x38] sm:$0xff]
    %v1127 = vld [vmem:[%s1118 + $0x40] sm:$0xff]
    %v1128 = vld [vmem:[%s1118 + $0x48] sm:$0xff]
    %v1129 = vld [vmem:[%s1118 + $0x50] sm:$0xff]
    %v1130 = vld [vmem:[%s1118 + $0x58] sm:$0xff]
    %v1131 = vld [vmem:[%s1118 + $0x60] sm:$0xff]
    %v1132 = vld [vmem:[%s1118 + $0x68] sm:$0xff]
    %v1133 = vld [vmem:[%s1118 + $0x70] sm:$0xff]
    %v1134 = vld [vmem:[%s1118 + $0x78] sm:$0xff]
    %s1135 = scalar_lea.vmem %s4, 6
    %v1136 = vld [vmem:[%s1135] sm:$0x1]
    %v1138 = vlaneseq
    %v1139 = vshrl.u32 %v1138, 7
    %v1140 = vsub.s32 0, %v1139
    %v1141 = vrot.slane %v1136, %v1140
    %v1143 = vrot.slane %v510, 6
    %v1144 = vrot.slane %v511, 5
    %v1145 = vsel %vm540, %v1144, %v1143
    %1147 = vmatprep.subr.mxu0 0.0
    %1148 = vmatpush1.msra.mxu0 %v1119
    %1149 = vmatprep.subr.mxu0 0.0
    %1150 = vmatpush1.msra.mxu0 %v1120
    %1151 = vmatprep.subr.mxu0 0.0
    %1152 = vmatpush1.msra.mxu0 %v1121
    %1153 = vmatprep.subr.mxu0 0.0
    %1154 = vmatpush1.msra.mxu0 %v1122
    %1155 = vmatprep.subr.mxu0 0.0
    %1156 = vmatpush1.msra.mxu0 %v1123
    %1157 = vmatprep.subr.mxu0 0.0
    %1158 = vmatpush1.msra.mxu0 %v1124
    %1159 = vmatprep.subr.mxu0 0.0
    %1160 = vmatpush1.msra.mxu0 %v1125
    %1161 = vmatprep.subr.mxu0 0.0
    %1162 = vmatpush1.msra.mxu0 %v1126
    %1163 = vmatprep.subr.mxu0 0.0
    %1164 = vmatpush1.msra.mxu0 %v1127
    %1165 = vmatprep.subr.mxu0 0.0
    %1166 = vmatpush1.msra.mxu0 %v1128
    %1167 = vmatprep.subr.mxu0 0.0
    %1168 = vmatpush1.msra.mxu0 %v1129
    %1169 = vmatprep.subr.mxu0 0.0
    %1170 = vmatpush1.msra.mxu0 %v1130
    %1171 = vmatprep.subr.mxu0 0.0
    %1172 = vmatpush1.msra.mxu0 %v1131
    %1173 = vmatprep.subr.mxu0 0.0
    %1174 = vmatpush1.msra.mxu0 %v1132
    %1175 = vmatprep.subr.mxu0 0.0
    %1176 = vmatpush1.msra.mxu0 %v1133
    %1177 = vmatprep.subr.mxu0 0.0
    %1178 = vmatpush1.msra.mxu0 %v1134
    %1179 = vmatprep.subr.mxu0 0.0
    %1180 = vmatpush1.msra.mxu0 0.0
    %1181 = vmatprep.subr.mxu0 0.0
    %1182 = vmatpush1.msra.mxu0 0.0
    %1183 = vmatprep.subr.mxu0 0.0
    %1184 = vmatpush1.msra.mxu0 0.0
    %1185 = vmatprep.subr.mxu0 0.0
    %1186 = vmatpush1.msra.mxu0 0.0
    %1187 = vmatprep.subr.mxu0 0.0
    %1188 = vmatpush1.msra.mxu0 0.0
    %1189 = vmatprep.subr.mxu0 0.0
    %1190 = vmatpush1.msra.mxu0 0.0
    %1191 = vmatprep.subr.mxu0 0.0
    %1192 = vmatpush1.msra.mxu0 0.0
    %1193 = vmatprep.subr.mxu0 0.0
    %1194 = vmatpush1.msra.mxu0 0.0
    %1195 = vmatprep.subr.mxu0 0.0
    %1196 = vmatpush1.msra.mxu0 0.0
    %1197 = vmatprep.subr.mxu0 0.0
    %1198 = vmatpush1.msra.mxu0 0.0
    %1199 = vmatprep.subr.mxu0 0.0
    %1200 = vmatpush1.msra.mxu0 0.0
    %1201 = vmatprep.subr.mxu0 0.0
    %1202 = vmatpush1.msra.mxu0 0.0
    %1203 = vmatprep.subr.mxu0 0.0
    %1204 = vmatpush1.msra.mxu0 0.0
    %1205 = vmatprep.subr.mxu0 0.0
    %1206 = vmatpush1.msra.mxu0 0.0
    %1207 = vmatprep.subr.mxu0 0.0
    %1208 = vmatpush1.msra.mxu0 0.0
    %1209 = vmatprep.subr.mxu0 0.0
    %1210 = vmatpush1.msra.mxu0 0.0
    %1211 = vmatprep.mubr.f32.mxu0 0.0
    %1212 = vmatmul.mubr.f32.gmra.mrb[0].mxu0 %v1145
    %v1213 = vpop.f32.mrb[0].mxu0
    %v1214 = vadd.f32 %v1141, %v1213
    %v1215 = vpop.f32.mrb[0].mxu0
    %1216 = vdwg.mxu0
    %s1217 = scalar_lea.vmem [#allocation9], 12
    %1218 = vst [vmem:[%s1217] sm:$0x3] %v1214
    %s1219 = scalar_lea.vmem [#allocation7], 896
    %v1220 = vld [vmem:[%s1219] sm:$0xff]
    %v1221 = vld [vmem:[%s1219 + $0x8] sm:$0xff]
    %v1222 = vld [vmem:[%s1219 + $0x10] sm:$0xff]
    %v1223 = vld [vmem:[%s1219 + $0x18] sm:$0xff]
    %v1224 = vld [vmem:[%s1219 + $0x20] sm:$0xff]
    %v1225 = vld [vmem:[%s1219 + $0x28] sm:$0xff]
    %v1226 = vld [vmem:[%s1219 + $0x30] sm:$0xff]
    %v1227 = vld [vmem:[%s1219 + $0x38] sm:$0xff]
    %v1228 = vld [vmem:[%s1219 + $0x40] sm:$0xff]
    %v1229 = vld [vmem:[%s1219 + $0x48] sm:$0xff]
    %v1230 = vld [vmem:[%s1219 + $0x50] sm:$0xff]
    %v1231 = vld [vmem:[%s1219 + $0x58] sm:$0xff]
    %v1232 = vld [vmem:[%s1219 + $0x60] sm:$0xff]
    %v1233 = vld [vmem:[%s1219 + $0x68] sm:$0xff]
    %v1234 = vld [vmem:[%s1219 + $0x70] sm:$0xff]
    %v1235 = vld [vmem:[%s1219 + $0x78] sm:$0xff]
    %s1236 = scalar_lea.vmem %s4, 7
    %v1237 = vld [vmem:[%s1236] sm:$0x1]
    %v1239 = vlaneseq
    %v1240 = vshrl.u32 %v1239, 7
    %v1241 = vsub.s32 0, %v1240
    %v1242 = vrot.slane %v1237, %v1241
    %v1244 = vrot.slane %v510, 7
    %v1245 = vrot.slane %v511, 6
    %v1246 = vsel %vm540, %v1245, %v1244
    %1248 = vmatprep.subr.mxu0 0.0
    %1249 = vmatpush1.msra.mxu0 %v1220
    %1250 = vmatprep.subr.mxu0 0.0
    %1251 = vmatpush1.msra.mxu0 %v1221
    %1252 = vmatprep.subr.mxu0 0.0
    %1253 = vmatpush1.msra.mxu0 %v1222
    %1254 = vmatprep.subr.mxu0 0.0
    %1255 = vmatpush1.msra.mxu0 %v1223
    %1256 = vmatprep.subr.mxu0 0.0
    %1257 = vmatpush1.msra.mxu0 %v1224
    %1258 = vmatprep.subr.mxu0 0.0
    %1259 = vmatpush1.msra.mxu0 %v1225
    %1260 = vmatprep.subr.mxu0 0.0
    %1261 = vmatpush1.msra.mxu0 %v1226
    %1262 = vmatprep.subr.mxu0 0.0
    %1263 = vmatpush1.msra.mxu0 %v1227
    %1264 = vmatprep.subr.mxu0 0.0
    %1265 = vmatpush1.msra.mxu0 %v1228
    %1266 = vmatprep.subr.mxu0 0.0
    %1267 = vmatpush1.msra.mxu0 %v1229
    %1268 = vmatprep.subr.mxu0 0.0
    %1269 = vmatpush1.msra.mxu0 %v1230
    %1270 = vmatprep.subr.mxu0 0.0
    %1271 = vmatpush1.msra.mxu0 %v1231
    %1272 = vmatprep.subr.mxu0 0.0
    %1273 = vmatpush1.msra.mxu0 %v1232
    %1274 = vmatprep.subr.mxu0 0.0
    %1275 = vmatpush1.msra.mxu0 %v1233
    %1276 = vmatprep.subr.mxu0 0.0
    %1277 = vmatpush1.msra.mxu0 %v1234
    %1278 = vmatprep.subr.mxu0 0.0
    %1279 = vmatpush1.msra.mxu0 %v1235
    %1280 = vmatprep.subr.mxu0 0.0
    %1281 = vmatpush1.msra.mxu0 0.0
    %1282 = vmatprep.subr.mxu0 0.0
    %1283 = vmatpush1.msra.mxu0 0.0
    %1284 = vmatprep.subr.mxu0 0.0
    %1285 = vmatpush1.msra.mxu0 0.0
    %1286 = vmatprep.subr.mxu0 0.0
    %1287 = vmatpush1.msra.mxu0 0.0
    %1288 = vmatprep.subr.mxu0 0.0
    %1289 = vmatpush1.msra.mxu0 0.0
    %1290 = vmatprep.subr.mxu0 0.0
    %1291 = vmatpush1.msra.mxu0 0.0
    %1292 = vmatprep.subr.mxu0 0.0
    %1293 = vmatpush1.msra.mxu0 0.0
    %1294 = vmatprep.subr.mxu0 0.0
    %1295 = vmatpush1.msra.mxu0 0.0
    %1296 = vmatprep.subr.mxu0 0.0
    %1297 = vmatpush1.msra.mxu0 0.0
    %1298 = vmatprep.subr.mxu0 0.0
    %1299 = vmatpush1.msra.mxu0 0.0
    %1300 = vmatprep.subr.mxu0 0.0
    %1301 = vmatpush1.msra.mxu0 0.0
    %1302 = vmatprep.subr.mxu0 0.0
    %1303 = vmatpush1.msra.mxu0 0.0
    %1304 = vmatprep.subr.mxu0 0.0
    %1305 = vmatpush1.msra.mxu0 0.0
    %1306 = vmatprep.subr.mxu0 0.0
    %1307 = vmatpush1.msra.mxu0 0.0
    %1308 = vmatprep.subr.mxu0 0.0
    %1309 = vmatpush1.msra.mxu0 0.0
    %1310 = vmatprep.subr.mxu0 0.0
    %1311 = vmatpush1.msra.mxu0 0.0
    %1312 = vmatprep.mubr.f32.mxu0 0.0
    %1313 = vmatmul.mubr.f32.gmra.mrb[0].mxu0 %v1246
    %v1314 = vpop.f32.mrb[0].mxu0
    %v1315 = vadd.f32 %v1242, %v1314
    %v1316 = vpop.f32.mrb[0].mxu0
    %1317 = vdwg.mxu0
    %s1318 = scalar_lea.vmem [#allocation9], 14
    %1319 = vst [vmem:[%s1318] sm:$0x3] %v1315
    // Predicated region
    $region34: #{tpu_custom_call.1} parent=1 // pred_check
      _
    $region35: #{tpu_custom_call.1} parent=1 // pred_check_branch
      %1321 = sbr.rel (0) target = $region37
    $region36: #{tpu_custom_call.1} parent=1 // pred_region
      %s1323 = ssub.s32 256, 256
      %1324 = vsyncadd [#allocation4], %s1323
      %s1325 = sshll.u32 [#allocation8], 4
      %s1326 = int_to_ptr.vmem [resolvable:$true] %s1325
      %1331 = dma.vmem_to_hbm [thread:$0]  %s1326, 256, %s5, [#allocation4], 128, 128, 8
    $region37: #{tpu_custom_call.1} parent=1 // pred_fallthru
      _
    // Predicated region
    $region38: #{tpu_custom_call.1} parent=1 // pred_check
      _
    $region39: #{tpu_custom_call.1} parent=1 // pred_check_branch
      %1333 = sbr.rel (0) target = $region41
    $region40: #{tpu_custom_call.1} parent=1 // pred_region
      %s1335 = ssub.s32 256, 256
      %1336 = vsyncadd [#allocation10], %s1335
      %s1337 = sshll.u32 [#allocation9], 4
      %s1338 = int_to_ptr.vmem [resolvable:$true] %s1337
      %1343 = dma.vmem_to_hbm [thread:$0]  %s1338, 256, %s6, [#allocation10], 32, 32, 2
    $region41: #{tpu_custom_call.1} parent=1 // pred_fallthru
      _
    // Predicated region
    $region42: #{tpu_custom_call.1} parent=1 // pred_check
      _
    $region43: #{tpu_custom_call.1} parent=1 // pred_check_branch
      %1345 = sbr.rel (0) target = $region45
    $region44: #{tpu_custom_call.1} parent=1 // pred_region
      %1346 = dma.done [#allocation4], 256
    $region45: #{tpu_custom_call.1} parent=1 // pred_fallthru
      _
    // Predicated region
    $region46: #{tpu_custom_call.1} parent=1 // pred_check
      _
    $region47: #{tpu_custom_call.1} parent=1 // pred_check_branch
      %1348 = sbr.rel (0) target = $region49
    $region48: #{tpu_custom_call.1} parent=1 // pred_region
      %1349 = dma.done [#allocation10], 256
    $region49: #{tpu_custom_call.1} parent=1 // pred_fallthru
      _
    %1350 = vsyncpa [#allocation3], 1
    %1351 = vsyncpa [#allocation6], 1
    %1352 = vsyncpa [#allocation4], 1
    %1353 = vsyncpa [#allocation10], 1

</llo_original>
